<compile_context>
chip_gen: v7x
topology: tpu7x:2x2x1
jax: 0.10.0
libtpu: 0.0.40
codegen_flags: <defaults>
</compile_context>

<pallas_src>
from functools import partial

import jax
import jax.numpy as jnp
from jax.experimental import pallas as pl
from jax.experimental.pallas import tpu as pltpu


def _layer_norm(y, gamma, beta, eps=1e-5):
    mu = jnp.mean(y, axis=-1, keepdims=True)
    var = jnp.mean((y - mu) ** 2, axis=-1, keepdims=True)
    return (y - mu) * jax.lax.rsqrt(var + eps) * gamma + beta


def encoder_kernel(len_ref,                          # (B,) int32, SMEM (scalar prefetch)
                   x_ref,                            # (1, S, D) f32 (read at l == 0)
                   wqkv_ref, bqkv_ref,               # (1, D, 3D) bf16, (1, 1, 3D) f32
                   wo_ref, bo_ref,                   # (1, D, D)  bf16, (1, 1, D)  f32
                   g1_ref, be1_ref, g2_ref, be2_ref,  # (1, 1, D) f32
                   w1_ref, b1_ref,                   # (1, D, dff) bf16, (1, 1, dff) f32
                   w2_ref, b2_ref,                   # (1, dff, D) bf16, (1, 1, D)   f32
                   o_ref,                            # (1, S, D) f32 (activation carry)
                   *, num_heads):
    b = pl.program_id(0)
    l = pl.program_id(1)

    # Layer 0 of each batch element: seed the VMEM-resident activation with x.
    # The output block index is (b, 0, 0) for every l, so this buffer carries
    # the activation across the whole layer stack and is written to HBM once.
    @pl.when(l == 0)
    def _():
        o_ref[0] = x_ref[0]

    x = o_ref[0]                                    # (S, D) f32
    S, D = x.shape
    H = num_heads
    dh = D // H
    scale = jnp.float32(1.0 / (dh ** 0.5))
    seq_len = len_ref[b]                            # valid (non-pad) key positions

    # ---- multi-head self-attention ------------------------------------------
    # Fused QKV: one (S, D) x (D, 3D) matmul, bf16 operands on the MXU, f32 acc.
    qkv = jnp.dot(x.astype(jnp.bfloat16), wqkv_ref[0],
                  preferred_element_type=jnp.float32) + bqkv_ref[0]    # (S, 3D)
    q, k, v = qkv[:, :D], qkv[:, D:2 * D], qkv[:, 2 * D:]

    # Split heads only for the score/context contractions (leading head axis).
    def split_heads(t):                             # (S, D) -> (H, S, dh)
        return jnp.stack([t[:, h * dh:(h + 1) * dh] for h in range(H)], axis=0)

    qh = split_heads(q).astype(jnp.bfloat16)
    kh = split_heads(k).astype(jnp.bfloat16)
    vh = split_heads(v).astype(jnp.bfloat16)

    # Batched contraction on the last dim (no transposed K materialized).
    scores = jnp.einsum('hqe,hke->hqk', qh, kh,
                        preferred_element_type=jnp.float32) * scale    # (H, S, S)

    # Key-padding mask from a (1, 1, S) iota; jnp.where broadcasts it.
    key_pos = jax.lax.broadcasted_iota(jnp.int32, (1, 1, S), 2)
    scores = jnp.where(key_pos < seq_len, scores, jnp.float32(-1e9))

    # Numerically-stable softmax, f32, exact divide.
    scores = scores - jnp.max(scores, axis=-1, keepdims=True)
    p = jnp.exp(scores)
    p = p / jnp.sum(p, axis=-1, keepdims=True)

    ctx = jnp.einsum('hqk,hke->hqe', p.astype(jnp.bfloat16), vh,
                     preferred_element_type=jnp.float32)               # (H, S, dh)

    # Fold heads back to (S, D), then a single K = D output projection.
    ctx2d = jnp.concatenate([ctx[h] for h in range(H)], axis=-1)       # (S, D)
    attn = jnp.dot(ctx2d.astype(jnp.bfloat16), wo_ref[0],
                   preferred_element_type=jnp.float32) + bo_ref[0]

    # dropout == identity at inference.
    h1 = _layer_norm(x + attn, g1_ref[0], be1_ref[0])                  # norm1

    # ---- point-wise feed-forward network -------------------------------------
    ff = jnp.dot(h1.astype(jnp.bfloat16), w1_ref[0],
                 preferred_element_type=jnp.float32) + b1_ref[0]
    ff = jnp.maximum(ff, 0.0)                                          # ReLU
    ff = jnp.dot(ff.astype(jnp.bfloat16), w2_ref[0],
                 preferred_element_type=jnp.float32) + b2_ref[0]

    o_ref[0] = _layer_norm(h1 + ff, g2_ref[0], be2_ref[0])             # norm2


def encoder_forward(x, lengths, layer_params, num_heads):
    """Runs the full L-layer encoder in a single fused pallas_call."""
    B, S, D = x.shape
    L = len(layer_params)
    dff = layer_params[0]["w1"].shape[1]

    def stack(name, dtype=None):
        a = jnp.stack([p[name] for p in layer_params], axis=0)
        return a.astype(dtype) if dtype is not None else a

    # Stack per-layer weights on a leading L axis; cast matmul weights to bf16
    # wrapper-side (halves weight DMA + VMEM; accumulation stays f32 in-kernel).
    wqkv = jnp.stack(
        [jnp.concatenate([p["wq"], p["wk"], p["wv"]], axis=1) for p in layer_params],
        axis=0).astype(jnp.bfloat16)                                   # (L, D, 3D)
    bqkv = jnp.stack(
        [jnp.concatenate([p["bq"], p["bk"], p["bv"]], axis=1) for p in layer_params],
        axis=0)                                                        # (L, 1, 3D)
    wo = stack("wo", jnp.bfloat16)                                     # (L, D, D)
    w1 = stack("w1", jnp.bfloat16)                                     # (L, D, dff)
    w2 = stack("w2", jnp.bfloat16)                                     # (L, dff, D)
    bo, b1, b2 = stack("bo"), stack("b1"), stack("b2")
    g1, be1, g2, be2 = stack("g1"), stack("be1"), stack("g2"), stack("be2")

    def per_layer(shape):
        # Weight block for layer l (selected by the inner, "arbitrary" grid axis),
        # double-buffered by the pipeline so layer l+1 DMA overlaps layer l compute.
        return pl.BlockSpec((1,) + shape,
                            lambda b, l, lens: (l,) + (0,) * len(shape))

    kernel = partial(encoder_kernel, num_heads=num_heads)
    grid_spec = pltpu.PrefetchScalarGridSpec(
        num_scalar_prefetch=1,                    # lengths -> SMEM
        grid=(B, L),                              # batch outer (parallel), layer inner
        in_specs=[
            pl.BlockSpec((1, S, D), lambda b, l, lens: (b, 0, 0)),     # x
            per_layer((D, 3 * D)), per_layer((1, 3 * D)),              # wqkv, bqkv
            per_layer((D, D)), per_layer((1, D)),                      # wo, bo
            per_layer((1, D)), per_layer((1, D)),                      # norm1 gamma, beta
            per_layer((1, D)), per_layer((1, D)),                      # norm2 gamma, beta
            per_layer((D, dff)), per_layer((1, dff)),                  # ffn W1, b1
            per_layer((dff, D)), per_layer((1, D)),                    # ffn W2, b2
        ],
        out_specs=pl.BlockSpec((1, S, D), lambda b, l, lens: (b, 0, 0)),
    )
    return pl.pallas_call(
        kernel,
        out_shape=jax.ShapeDtypeStruct((B, S, D), jnp.float32),
        grid_spec=grid_spec,
        compiler_params=pltpu.CompilerParams(
            dimension_semantics=("parallel", "arbitrary"),
            # At these demo shapes actual VMEM use is a few KiB; re-budget when
            # row/KV tiles are enlarged (<=~48-56 MiB on v7x, can go higher on v6e).
            vmem_limit_bytes=32 * 1024 * 1024),
    )(lengths, x, wqkv, bqkv, wo, bo, g1, be1, g2, be2, w1, b1, w2, b2)


def init_encoder_params(key, num_layers, d_model, dff):
    """Deterministic synthetic init (shapes match the PyTorch module).

    Linear weights are stored [in, out] (transposed vs. nn.Linear's [out, in]);
    1-D params are stored as [1, N].
    """
    layers = []
    for _ in range(num_layers):
        keys = jax.random.split(key, 13)
        key = keys[0]
        s = 0.02
        p = {
            "wq": s * jax.random.normal(keys[1], (d_model, d_model), jnp.float32),
            "bq": jnp.zeros((1, d_model), jnp.float32),
            "wk": s * jax.random.normal(keys[2], (d_model, d_model), jnp.float32),
            "bk": jnp.zeros((1, d_model), jnp.float32),
            "wv": s * jax.random.normal(keys[3], (d_model, d_model), jnp.float32),
            "bv": jnp.zeros((1, d_model), jnp.float32),
            "wo": s * jax.random.normal(keys[4], (d_model, d_model), jnp.float32),
            "bo": jnp.zeros((1, d_model), jnp.float32),
            "g1": jnp.ones((1, d_model), jnp.float32),
            "be1": jnp.zeros((1, d_model), jnp.float32),
            "g2": jnp.ones((1, d_model), jnp.float32),
            "be2": jnp.zeros((1, d_model), jnp.float32),
            "w1": s * jax.random.normal(keys[5], (d_model, dff), jnp.float32),
            "b1": jnp.zeros((1, dff), jnp.float32),
            "w2": s * jax.random.normal(keys[6], (dff, d_model), jnp.float32),
            "b2": jnp.zeros((1, d_model), jnp.float32),
        }
        layers.append(p)
    return layers


if __name__ == "__main__":
    # Small, module-consistent shapes.
    B, S, D, H, DFF, NUM_LAYERS = 2, 8, 32, 4, 64, 2

    key = jax.random.PRNGKey(0)
    kx, kp = jax.random.split(key)

    x = jax.random.normal(kx, (B, S, D), jnp.float32)

    # Padding mask expressed as per-batch valid lengths (mask[b, i, j] = j < lengths[b]):
    # batch 0 attends to all 8 positions, batch 1 to the first 6.
    lengths = jnp.array([8, 6], jnp.int32)

    params = init_encoder_params(kp, NUM_LAYERS, D, DFF)

    out = encoder_forward(x, lengths, params, H)
    jax.block_until_ready(out)
    assert out.shape == (B, S, D)
    assert bool(jnp.all(jnp.isfinite(out)))
    print("KERNEL_OK")
</pallas_src>

<mosaic_0001>
module attributes {stable_mosaic.version = 11 : i64} {
  func.func @encoder_kernel(%arg0: i32, %arg1: i32, %arg2: memref<2xi32, #tpu.memory_space<smem>>, %arg3: memref<1x8x32xf32, #tpu.memory_space<vmem>>, %arg4: memref<1x32x96xbf16, #tpu.memory_space<vmem>>, %arg5: memref<1x1x96xf32, #tpu.memory_space<vmem>>, %arg6: memref<1x32x32xbf16, #tpu.memory_space<vmem>>, %arg7: memref<1x1x32xf32, #tpu.memory_space<vmem>>, %arg8: memref<1x1x32xf32, #tpu.memory_space<vmem>>, %arg9: memref<1x1x32xf32, #tpu.memory_space<vmem>>, %arg10: memref<1x1x32xf32, #tpu.memory_space<vmem>>, %arg11: memref<1x1x32xf32, #tpu.memory_space<vmem>>, %arg12: memref<1x32x64xbf16, #tpu.memory_space<vmem>>, %arg13: memref<1x1x64xf32, #tpu.memory_space<vmem>>, %arg14: memref<1x64x32xbf16, #tpu.memory_space<vmem>>, %arg15: memref<1x1x32xf32, #tpu.memory_space<vmem>>, %arg16: memref<1x8x32xf32, #tpu.memory_space<vmem>>) attributes {dimension_semantics = [#tpu.dimension_semantics<parallel>, #tpu.dimension_semantics<arbitrary>], iteration_bounds = array<i64: 2, 2>, scalar_prefetch = 1 : i64, scratch_operands = 0 : i64, tpu.core_type = #tpu.core_type<tc>, window_params = [{transform_indices = @transform_0, window_bounds = array<i64: 1, 8, 32>}, {transform_indices = @transform_1, window_bounds = array<i64: 1, 32, 96>}, {transform_indices = @transform_2, window_bounds = array<i64: 1, 1, 96>}, {transform_indices = @transform_3, window_bounds = array<i64: 1, 32, 32>}, {transform_indices = @transform_4, window_bounds = array<i64: 1, 1, 32>}, {transform_indices = @transform_5, window_bounds = array<i64: 1, 1, 32>}, {transform_indices = @transform_6, window_bounds = array<i64: 1, 1, 32>}, {transform_indices = @transform_7, window_bounds = array<i64: 1, 1, 32>}, {transform_indices = @transform_8, window_bounds = array<i64: 1, 1, 32>}, {transform_indices = @transform_9, window_bounds = array<i64: 1, 32, 64>}, {transform_indices = @transform_10, window_bounds = array<i64: 1, 1, 64>}, {transform_indices = @transform_11, window_bounds = array<i64: 1, 64, 32>}, {transform_indices = @transform_12, window_bounds = array<i64: 1, 1, 32>}, {transform_indices = @transform_13, window_bounds = array<i64: 1, 8, 32>}]} {
    %c0_i32 = arith.constant 0 : i32
    %0 = arith.cmpi eq, %arg1, %c0_i32 : i32
    %1 = arith.extui %0 : i1 to i32
    %c0_i32_0 = arith.constant 0 : i32
    %2 = arith.cmpi ne, %1, %c0_i32_0 : i32
    scf.if %2 {
      %c0_62 = arith.constant 0 : index
      %c0_63 = arith.constant 0 : index
      %c0_64 = arith.constant 0 : index
      %161 = vector.load %arg3[%c0_62, %c0_63, %c0_64] : memref<1x8x32xf32, #tpu.memory_space<vmem>>, vector<1x8x32xf32>
      %162 = vector.shape_cast %161 : vector<1x8x32xf32> to vector<8x32xf32>
      %c0_65 = arith.constant 0 : index
      %c0_66 = arith.constant 0 : index
      %c0_67 = arith.constant 0 : index
      %163 = vector.load %arg16[%c0_65, %c0_66, %c0_67] : memref<1x8x32xf32, #tpu.memory_space<vmem>>, vector<1x8x32xf32>
      %164 = vector.shape_cast %163 : vector<1x8x32xf32> to vector<8x32xf32>
      %165 = vector.shape_cast %162 : vector<8x32xf32> to vector<1x8x32xf32>
      tpu.vector_store %arg16[%c0_65, %c0_66, %c0_67], %165 {strides = array<i32>} : memref<1x8x32xf32, #tpu.memory_space<vmem>>, vector<1x8x32xf32>,
    } else {
    }
    %c0 = arith.constant 0 : index
    %c0_1 = arith.constant 0 : index
    %c0_2 = arith.constant 0 : index
    %3 = vector.load %arg16[%c0, %c0_1, %c0_2] : memref<1x8x32xf32, #tpu.memory_space<vmem>>, vector<1x8x32xf32>
    %4 = vector.shape_cast %3 : vector<1x8x32xf32> to vector<8x32xf32>
    %5 = arith.index_cast %arg0 : i32 to index
    %6 = memref.load %arg2[%5] : memref<2xi32, #tpu.memory_space<smem>>
    %7 = arith.truncf %4 : vector<8x32xf32> to vector<8x32xbf16>
    %c0_3 = arith.constant 0 : index
    %c0_4 = arith.constant 0 : index
    %c0_5 = arith.constant 0 : index
    %8 = vector.load %arg4[%c0_3, %c0_4, %c0_5] : memref<1x32x96xbf16, #tpu.memory_space<vmem>>, vector<1x32x96xbf16>
    %9 = vector.shape_cast %8 : vector<1x32x96xbf16> to vector<32x96xbf16>
    %cst = arith.constant dense<0.000000e+00> : vector<8x96xf32>
    %10 = tpu.matmul %7, %9, %cst {dimension_numbers = #tpu.dot_dimension_numbers<[1], [0], [0], [1], [0, 0, 1, 1], [], []>} : vector<8x32xbf16>, vector<32x96xbf16>, vector<8x96xf32> -> vector<8x96xf32>
    %c0_6 = arith.constant 0 : index
    %c0_7 = arith.constant 0 : index
    %c0_8 = arith.constant 0 : index
    %11 = vector.load %arg5[%c0_6, %c0_7, %c0_8] : memref<1x1x96xf32, #tpu.memory_space<vmem>>, vector<1x1x96xf32>
    %12 = vector.shape_cast %11 : vector<1x1x96xf32> to vector<1x96xf32>
    %13 = vector.broadcast %12 : vector<1x96xf32> to vector<8x96xf32>
    %14 = arith.addf %10, %13 : vector<8x96xf32>
    %15 = vector.extract_strided_slice %14 {offsets = [0, 0], sizes = [8, 32], strides = [1, 1]} : vector<8x96xf32> to vector<8x32xf32>
    %16 = vector.extract_strided_slice %14 {offsets = [0, 32], sizes = [8, 32], strides = [1, 1]} : vector<8x96xf32> to vector<8x32xf32>
    %17 = vector.extract_strided_slice %14 {offsets = [0, 64], sizes = [8, 32], strides = [1, 1]} : vector<8x96xf32> to vector<8x32xf32>
    %18 = vector.extract_strided_slice %15 {offsets = [0, 0], sizes = [8, 8], strides = [1, 1]} : vector<8x32xf32> to vector<8x8xf32>
    %19 = vector.extract_strided_slice %15 {offsets = [0, 8], sizes = [8, 8], strides = [1, 1]} : vector<8x32xf32> to vector<8x8xf32>
    %20 = vector.extract_strided_slice %15 {offsets = [0, 16], sizes = [8, 8], strides = [1, 1]} : vector<8x32xf32> to vector<8x8xf32>
    %21 = vector.extract_strided_slice %15 {offsets = [0, 24], sizes = [8, 8], strides = [1, 1]} : vector<8x32xf32> to vector<8x8xf32>
    %22 = vector.shape_cast %18 : vector<8x8xf32> to vector<1x8x8xf32>
    %23 = vector.shape_cast %19 : vector<8x8xf32> to vector<1x8x8xf32>
    %24 = vector.shape_cast %20 : vector<8x8xf32> to vector<1x8x8xf32>
    %25 = vector.shape_cast %21 : vector<8x8xf32> to vector<1x8x8xf32>
    %26 = tpu.concatenate %22, %23, %24, %25 in 0 : vector<1x8x8xf32>, vector<1x8x8xf32>, vector<1x8x8xf32>, vector<1x8x8xf32> -> vector<4x8x8xf32>
    %27 = arith.truncf %26 : vector<4x8x8xf32> to vector<4x8x8xbf16>
    %28 = vector.extract_strided_slice %16 {offsets = [0, 0], sizes = [8, 8], strides = [1, 1]} : vector<8x32xf32> to vector<8x8xf32>
    %29 = vector.extract_strided_slice %16 {offsets = [0, 8], sizes = [8, 8], strides = [1, 1]} : vector<8x32xf32> to vector<8x8xf32>
    %30 = vector.extract_strided_slice %16 {offsets = [0, 16], sizes = [8, 8], strides = [1, 1]} : vector<8x32xf32> to vector<8x8xf32>
    %31 = vector.extract_strided_slice %16 {offsets = [0, 24], sizes = [8, 8], strides = [1, 1]} : vector<8x32xf32> to vector<8x8xf32>
    %32 = vector.shape_cast %28 : vector<8x8xf32> to vector<1x8x8xf32>
    %33 = vector.shape_cast %29 : vector<8x8xf32> to vector<1x8x8xf32>
    %34 = vector.shape_cast %30 : vector<8x8xf32> to vector<1x8x8xf32>
    %35 = vector.shape_cast %31 : vector<8x8xf32> to vector<1x8x8xf32>
    %36 = tpu.concatenate %32, %33, %34, %35 in 0 : vector<1x8x8xf32>, vector<1x8x8xf32>, vector<1x8x8xf32>, vector<1x8x8xf32> -> vector<4x8x8xf32>
    %37 = arith.truncf %36 : vector<4x8x8xf32> to vector<4x8x8xbf16>
    %38 = vector.extract_strided_slice %17 {offsets = [0, 0], sizes = [8, 8], strides = [1, 1]} : vector<8x32xf32> to vector<8x8xf32>
    %39 = vector.extract_strided_slice %17 {offsets = [0, 8], sizes = [8, 8], strides = [1, 1]} : vector<8x32xf32> to vector<8x8xf32>
    %40 = vector.extract_strided_slice %17 {offsets = [0, 16], sizes = [8, 8], strides = [1, 1]} : vector<8x32xf32> to vector<8x8xf32>
    %41 = vector.extract_strided_slice %17 {offsets = [0, 24], sizes = [8, 8], strides = [1, 1]} : vector<8x32xf32> to vector<8x8xf32>
    %42 = vector.shape_cast %38 : vector<8x8xf32> to vector<1x8x8xf32>
    %43 = vector.shape_cast %39 : vector<8x8xf32> to vector<1x8x8xf32>
    %44 = vector.shape_cast %40 : vector<8x8xf32> to vector<1x8x8xf32>
    %45 = vector.shape_cast %41 : vector<8x8xf32> to vector<1x8x8xf32>
    %46 = tpu.concatenate %42, %43, %44, %45 in 0 : vector<1x8x8xf32>, vector<1x8x8xf32>, vector<1x8x8xf32>, vector<1x8x8xf32> -> vector<4x8x8xf32>
    %47 = arith.truncf %46 : vector<4x8x8xf32> to vector<4x8x8xbf16>
    "tpu.trace_start"() <{level = 10 : i32, message = "hqe,hke->hqk"}> : () -> ()
    %cst_9 = arith.constant dense<0.000000e+00> : vector<4x8x8xf32>
    %48 = tpu.matmul %27, %37, %cst_9 {dimension_numbers = #tpu.dot_dimension_numbers<[2], [2], [1], [1], [0, 0, 0, 1, 1, 1], [0], [0]>} : vector<4x8x8xbf16>, vector<4x8x8xbf16>, vector<4x8x8xf32> -> vector<4x8x8xf32>
    "tpu.trace_stop"() : () -> ()
    %cst_10 = arith.constant 0.353553385 : f32
    %49 = vector.broadcast %cst_10 : f32 to vector<4x8x8xf32>
    %50 = arith.mulf %48, %49 : vector<4x8x8xf32>
    %51 = tpu.iota {dimensions = array<i32: 2>} : vector<1x1x8xi32>
    %52 = vector.broadcast %6 : i32 to vector<1x1x8xi32>
    %53 = arith.cmpi slt, %51, %52 : vector<1x1x8xi32>
    %cst_11 = arith.constant -1.000000e+09 : f32
    %54 = vector.shape_cast %53 : vector<1x1x8xi1> to vector<1x1x8xi1>
    %55 = vector.broadcast %54 : vector<1x1x8xi1> to vector<4x8x8xi1>
    %56 = vector.broadcast %cst_11 : f32 to vector<4x8x8xf32>
    %57 = arith.select %55, %50, %56 : vector<4x8x8xi1>, vector<4x8x8xf32>
    %cst_12 = arith.constant dense<0xFF800000> : vector<4x8xf32>
    %58 = vector.multi_reduction <maximumf>, %57, %cst_12 [2] : vector<4x8x8xf32> to vector<4x8xf32>
    %59 = vector.shape_cast %58 : vector<4x8xf32> to vector<4x8x1xf32>
    %60 = vector.broadcast %59 : vector<4x8x1xf32> to vector<4x8x8xf32>
    %61 = arith.subf %57, %60 : vector<4x8x8xf32>
    %62 = math.exp %61 : vector<4x8x8xf32>
    %cst_13 = arith.constant dense<0.000000e+00> : vector<4x8xf32>
    %63 = vector.multi_reduction <add>, %62, %cst_13 [2] : vector<4x8x8xf32> to vector<4x8xf32>
    %64 = vector.shape_cast %63 : vector<4x8xf32> to vector<4x8x1xf32>
    %65 = vector.broadcast %64 : vector<4x8x1xf32> to vector<4x8x8xf32>
    %66 = arith.divf %62, %65 : vector<4x8x8xf32>
    %67 = arith.truncf %66 : vector<4x8x8xf32> to vector<4x8x8xbf16>
    "tpu.trace_start"() <{level = 10 : i32, message = "hqk,hke->hqe"}> : () -> ()
    %cst_14 = arith.constant dense<0.000000e+00> : vector<4x8x8xf32>
    %68 = tpu.matmul %67, %47, %cst_14 {dimension_numbers = #tpu.dot_dimension_numbers<[2], [1], [1], [2], [0, 0, 0, 1, 1, 2], [0], [0]>} : vector<4x8x8xbf16>, vector<4x8x8xbf16>, vector<4x8x8xf32> -> vector<4x8x8xf32>
    "tpu.trace_stop"() : () -> ()
    %69 = vector.extract_strided_slice %68 {offsets = [0, 0, 0], sizes = [1, 8, 8], strides = [1, 1, 1]} : vector<4x8x8xf32> to vector<1x8x8xf32>
    %70 = vector.shape_cast %69 : vector<1x8x8xf32> to vector<8x8xf32>
    %71 = vector.extract_strided_slice %68 {offsets = [1, 0, 0], sizes = [1, 8, 8], strides = [1, 1, 1]} : vector<4x8x8xf32> to vector<1x8x8xf32>
    %72 = vector.shape_cast %71 : vector<1x8x8xf32> to vector<8x8xf32>
    %73 = vector.extract_strided_slice %68 {offsets = [2, 0, 0], sizes = [1, 8, 8], strides = [1, 1, 1]} : vector<4x8x8xf32> to vector<1x8x8xf32>
    %74 = vector.shape_cast %73 : vector<1x8x8xf32> to vector<8x8xf32>
    %75 = vector.extract_strided_slice %68 {offsets = [3, 0, 0], sizes = [1, 8, 8], strides = [1, 1, 1]} : vector<4x8x8xf32> to vector<1x8x8xf32>
    %76 = vector.shape_cast %75 : vector<1x8x8xf32> to vector<8x8xf32>
    %77 = tpu.concatenate %70, %72, %74, %76 in 1 : vector<8x8xf32>, vector<8x8xf32>, vector<8x8xf32>, vector<8x8xf32> -> vector<8x32xf32>
    %78 = arith.truncf %77 : vector<8x32xf32> to vector<8x32xbf16>
    %c0_15 = arith.constant 0 : index
    %c0_16 = arith.constant 0 : index
    %c0_17 = arith.constant 0 : index
    %79 = vector.load %arg6[%c0_15, %c0_16, %c0_17] : memref<1x32x32xbf16, #tpu.memory_space<vmem>>, vector<1x32x32xbf16>
    %80 = vector.shape_cast %79 : vector<1x32x32xbf16> to vector<32x32xbf16>
    %cst_18 = arith.constant dense<0.000000e+00> : vector<8x32xf32>
    %81 = tpu.matmul %78, %80, %cst_18 {dimension_numbers = #tpu.dot_dimension_numbers<[1], [0], [0], [1], [0, 0, 1, 1], [], []>} : vector<8x32xbf16>, vector<32x32xbf16>, vector<8x32xf32> -> vector<8x32xf32>
    %c0_19 = arith.constant 0 : index
    %c0_20 = arith.constant 0 : index
    %c0_21 = arith.constant 0 : index
    %82 = vector.load %arg7[%c0_19, %c0_20, %c0_21] : memref<1x1x32xf32, #tpu.memory_space<vmem>>, vector<1x1x32xf32>
    %83 = vector.shape_cast %82 : vector<1x1x32xf32> to vector<1x32xf32>
    %84 = vector.broadcast %83 : vector<1x32xf32> to vector<8x32xf32>
    %85 = arith.addf %81, %84 : vector<8x32xf32>
    %86 = arith.addf %4, %85 : vector<8x32xf32>
    %c0_22 = arith.constant 0 : index
    %c0_23 = arith.constant 0 : index
    %c0_24 = arith.constant 0 : index
    %87 = vector.load %arg8[%c0_22, %c0_23, %c0_24] : memref<1x1x32xf32, #tpu.memory_space<vmem>>, vector<1x1x32xf32>
    %88 = vector.shape_cast %87 : vector<1x1x32xf32> to vector<1x32xf32>
    %c0_25 = arith.constant 0 : index
    %c0_26 = arith.constant 0 : index
    %c0_27 = arith.constant 0 : index
    %89 = vector.load %arg9[%c0_25, %c0_26, %c0_27] : memref<1x1x32xf32, #tpu.memory_space<vmem>>, vector<1x1x32xf32>
    %90 = vector.shape_cast %89 : vector<1x1x32xf32> to vector<1x32xf32>
    %cst_28 = arith.constant dense<0.000000e+00> : vector<8xf32>
    %91 = vector.multi_reduction <add>, %86, %cst_28 [1] : vector<8x32xf32> to vector<8xf32>
    %92 = vector.shape_cast %91 : vector<8xf32> to vector<8x1xf32>
    %cst_29 = arith.constant 3.200000e+01 : f32
    %93 = vector.broadcast %cst_29 : f32 to vector<8x1xf32>
    %94 = arith.divf %92, %93 : vector<8x1xf32>
    %95 = vector.broadcast %94 : vector<8x1xf32> to vector<8x32xf32>
    %96 = arith.subf %86, %95 : vector<8x32xf32>
    %97 = arith.mulf %96, %96 : vector<8x32xf32>
    %cst_30 = arith.constant dense<0.000000e+00> : vector<8xf32>
    %98 = vector.multi_reduction <add>, %97, %cst_30 [1] : vector<8x32xf32> to vector<8xf32>
    %99 = vector.shape_cast %98 : vector<8xf32> to vector<8x1xf32>
    %cst_31 = arith.constant 3.200000e+01 : f32
    %100 = vector.broadcast %cst_31 : f32 to vector<8x1xf32>
    %101 = arith.divf %99, %100 : vector<8x1xf32>
    %102 = vector.broadcast %94 : vector<8x1xf32> to vector<8x32xf32>
    %103 = arith.subf %86, %102 : vector<8x32xf32>
    %cst_32 = arith.constant 9.99999974E-6 : f32
    %104 = vector.broadcast %cst_32 : f32 to vector<8x1xf32>
    %105 = arith.addf %101, %104 : vector<8x1xf32>
    %106 = math.rsqrt %105 : vector<8x1xf32>
    %107 = vector.broadcast %106 : vector<8x1xf32> to vector<8x32xf32>
    %108 = arith.mulf %103, %107 : vector<8x32xf32>
    %109 = vector.broadcast %88 : vector<1x32xf32> to vector<8x32xf32>
    %110 = arith.mulf %108, %109 : vector<8x32xf32>
    %111 = vector.broadcast %90 : vector<1x32xf32> to vector<8x32xf32>
    %112 = arith.addf %110, %111 : vector<8x32xf32>
    %113 = arith.truncf %112 : vector<8x32xf32> to vector<8x32xbf16>
    %c0_33 = arith.constant 0 : index
    %c0_34 = arith.constant 0 : index
    %c0_35 = arith.constant 0 : index
    %114 = vector.load %arg12[%c0_33, %c0_34, %c0_35] : memref<1x32x64xbf16, #tpu.memory_space<vmem>>, vector<1x32x64xbf16>
    %115 = vector.shape_cast %114 : vector<1x32x64xbf16> to vector<32x64xbf16>
    %cst_36 = arith.constant dense<0.000000e+00> : vector<8x64xf32>
    %116 = tpu.matmul %113, %115, %cst_36 {dimension_numbers = #tpu.dot_dimension_numbers<[1], [0], [0], [1], [0, 0, 1, 1], [], []>} : vector<8x32xbf16>, vector<32x64xbf16>, vector<8x64xf32> -> vector<8x64xf32>
    %c0_37 = arith.constant 0 : index
    %c0_38 = arith.constant 0 : index
    %c0_39 = arith.constant 0 : index
    %117 = vector.load %arg13[%c0_37, %c0_38, %c0_39] : memref<1x1x64xf32, #tpu.memory_space<vmem>>, vector<1x1x64xf32>
    %118 = vector.shape_cast %117 : vector<1x1x64xf32> to vector<1x64xf32>
    %119 = vector.broadcast %118 : vector<1x64xf32> to vector<8x64xf32>
    %120 = arith.addf %116, %119 : vector<8x64xf32>
    %cst_40 = arith.constant 0.000000e+00 : f32
    %121 = vector.broadcast %cst_40 : f32 to vector<8x64xf32>
    %122 = arith.maximumf %120, %121 : vector<8x64xf32>
    %123 = arith.truncf %122 : vector<8x64xf32> to vector<8x64xbf16>
    %c0_41 = arith.constant 0 : index
    %c0_42 = arith.constant 0 : index
    %c0_43 = arith.constant 0 : index
    %124 = vector.load %arg14[%c0_41, %c0_42, %c0_43] : memref<1x64x32xbf16, #tpu.memory_space<vmem>>, vector<1x64x32xbf16>
    %125 = vector.shape_cast %124 : vector<1x64x32xbf16> to vector<64x32xbf16>
    %cst_44 = arith.constant dense<0.000000e+00> : vector<8x32xf32>
    %126 = tpu.matmul %123, %125, %cst_44 {dimension_numbers = #tpu.dot_dimension_numbers<[1], [0], [0], [1], [0, 0, 1, 1], [], []>} : vector<8x64xbf16>, vector<64x32xbf16>, vector<8x32xf32> -> vector<8x32xf32>
    %c0_45 = arith.constant 0 : index
    %c0_46 = arith.constant 0 : index
    %c0_47 = arith.constant 0 : index
    %127 = vector.load %arg15[%c0_45, %c0_46, %c0_47] : memref<1x1x32xf32, #tpu.memory_space<vmem>>, vector<1x1x32xf32>
    %128 = vector.shape_cast %127 : vector<1x1x32xf32> to vector<1x32xf32>
    %129 = vector.broadcast %128 : vector<1x32xf32> to vector<8x32xf32>
    %130 = arith.addf %126, %129 : vector<8x32xf32>
    %131 = arith.addf %112, %130 : vector<8x32xf32>
    %c0_48 = arith.constant 0 : index
    %c0_49 = arith.constant 0 : index
    %c0_50 = arith.constant 0 : index
    %132 = vector.load %arg10[%c0_48, %c0_49, %c0_50] : memref<1x1x32xf32, #tpu.memory_space<vmem>>, vector<1x1x32xf32>
    %133 = vector.shape_cast %132 : vector<1x1x32xf32> to vector<1x32xf32>
    %c0_51 = arith.constant 0 : index
    %c0_52 = arith.constant 0 : index
    %c0_53 = arith.constant 0 : index
    %134 = vector.load %arg11[%c0_51, %c0_52, %c0_53] : memref<1x1x32xf32, #tpu.memory_space<vmem>>, vector<1x1x32xf32>
    %135 = vector.shape_cast %134 : vector<1x1x32xf32> to vector<1x32xf32>
    %cst_54 = arith.constant dense<0.000000e+00> : vector<8xf32>
    %136 = vector.multi_reduction <add>, %131, %cst_54 [1] : vector<8x32xf32> to vector<8xf32>
    %137 = vector.shape_cast %136 : vector<8xf32> to vector<8x1xf32>
    %cst_55 = arith.constant 3.200000e+01 : f32
    %138 = vector.broadcast %cst_55 : f32 to vector<8x1xf32>
    %139 = arith.divf %137, %138 : vector<8x1xf32>
    %140 = vector.broadcast %139 : vector<8x1xf32> to vector<8x32xf32>
    %141 = arith.subf %131, %140 : vector<8x32xf32>
    %142 = arith.mulf %141, %141 : vector<8x32xf32>
    %cst_56 = arith.constant dense<0.000000e+00> : vector<8xf32>
    %143 = vector.multi_reduction <add>, %142, %cst_56 [1] : vector<8x32xf32> to vector<8xf32>
    %144 = vector.shape_cast %143 : vector<8xf32> to vector<8x1xf32>
    %cst_57 = arith.constant 3.200000e+01 : f32
    %145 = vector.broadcast %cst_57 : f32 to vector<8x1xf32>
    %146 = arith.divf %144, %145 : vector<8x1xf32>
    %147 = vector.broadcast %139 : vector<8x1xf32> to vector<8x32xf32>
    %148 = arith.subf %131, %147 : vector<8x32xf32>
    %cst_58 = arith.constant 9.99999974E-6 : f32
    %149 = vector.broadcast %cst_58 : f32 to vector<8x1xf32>
    %150 = arith.addf %146, %149 : vector<8x1xf32>
    %151 = math.rsqrt %150 : vector<8x1xf32>
    %152 = vector.broadcast %151 : vector<8x1xf32> to vector<8x32xf32>
    %153 = arith.mulf %148, %152 : vector<8x32xf32>
    %154 = vector.broadcast %133 : vector<1x32xf32> to vector<8x32xf32>
    %155 = arith.mulf %153, %154 : vector<8x32xf32>
    %156 = vector.broadcast %135 : vector<1x32xf32> to vector<8x32xf32>
    %157 = arith.addf %155, %156 : vector<8x32xf32>
    %c0_59 = arith.constant 0 : index
    %c0_60 = arith.constant 0 : index
    %c0_61 = arith.constant 0 : index
    %158 = vector.load %arg16[%c0_59, %c0_60, %c0_61] : memref<1x8x32xf32, #tpu.memory_space<vmem>>, vector<1x8x32xf32>
    %159 = vector.shape_cast %158 : vector<1x8x32xf32> to vector<8x32xf32>
    %160 = vector.shape_cast %157 : vector<8x32xf32> to vector<1x8x32xf32>
    tpu.vector_store %arg16[%c0_59, %c0_60, %c0_61], %160 {strides = array<i32>} : memref<1x8x32xf32, #tpu.memory_space<vmem>>, vector<1x8x32xf32>,
    return
  }
  func.func @transform_0(%arg0: i32, %arg1: i32, %arg2: memref<2xi32, #tpu.memory_space<smem>>) -> (i32, i32, i32) {
    %c0_i32 = arith.constant 0 : i32
    %c0_i32_0 = arith.constant 0 : i32
    %c0_i32_1 = arith.constant 0 : i32
    return %arg0, %c0_i32, %c0_i32_0 : i32, i32, i32
  }
  func.func @transform_1(%arg0: i32, %arg1: i32, %arg2: memref<2xi32, #tpu.memory_space<smem>>) -> (i32, i32, i32) {
    %c0_i32 = arith.constant 0 : i32
    %c0_i32_0 = arith.constant 0 : i32
    %c0_i32_1 = arith.constant 0 : i32
    return %arg1, %c0_i32, %c0_i32_0 : i32, i32, i32
  }
  func.func @transform_2(%arg0: i32, %arg1: i32, %arg2: memref<2xi32, #tpu.memory_space<smem>>) -> (i32, i32, i32) {
    %c0_i32 = arith.constant 0 : i32
    %c0_i32_0 = arith.constant 0 : i32
    %c0_i32_1 = arith.constant 0 : i32
    return %arg1, %c0_i32, %c0_i32_0 : i32, i32, i32
  }
  func.func @transform_3(%arg0: i32, %arg1: i32, %arg2: memref<2xi32, #tpu.memory_space<smem>>) -> (i32, i32, i32) {
    %c0_i32 = arith.constant 0 : i32
    %c0_i32_0 = arith.constant 0 : i32
    %c0_i32_1 = arith.constant 0 : i32
    return %arg1, %c0_i32, %c0_i32_0 : i32, i32, i32
  }
  func.func @transform_4(%arg0: i32, %arg1: i32, %arg2: memref<2xi32, #tpu.memory_space<smem>>) -> (i32, i32, i32) {
    %c0_i32 = arith.constant 0 : i32
    %c0_i32_0 = arith.constant 0 : i32
    %c0_i32_1 = arith.constant 0 : i32
    return %arg1, %c0_i32, %c0_i32_0 : i32, i32, i32
  }
  func.func @transform_5(%arg0: i32, %arg1: i32, %arg2: memref<2xi32, #tpu.memory_space<smem>>) -> (i32, i32, i32) {
    %c0_i32 = arith.constant 0 : i32
    %c0_i32_0 = arith.constant 0 : i32
    %c0_i32_1 = arith.constant 0 : i32
    return %arg1, %c0_i32, %c0_i32_0 : i32, i32, i32
  }
  func.func @transform_6(%arg0: i32, %arg1: i32, %arg2: memref<2xi32, #tpu.memory_space<smem>>) -> (i32, i32, i32) {
    %c0_i32 = arith.constant 0 : i32
    %c0_i32_0 = arith.constant 0 : i32
    %c0_i32_1 = arith.constant 0 : i32
    return %arg1, %c0_i32, %c0_i32_0 : i32, i32, i32
  }
  func.func @transform_7(%arg0: i32, %arg1: i32, %arg2: memref<2xi32, #tpu.memory_space<smem>>) -> (i32, i32, i32) {
    %c0_i32 = arith.constant 0 : i32
    %c0_i32_0 = arith.constant 0 : i32
    %c0_i32_1 = arith.constant 0 : i32
    return %arg1, %c0_i32, %c0_i32_0 : i32, i32, i32
  }
  func.func @transform_8(%arg0: i32, %arg1: i32, %arg2: memref<2xi32, #tpu.memory_space<smem>>) -> (i32, i32, i32) {
    %c0_i32 = arith.constant 0 : i32
    %c0_i32_0 = arith.constant 0 : i32
    %c0_i32_1 = arith.constant 0 : i32
    return %arg1, %c0_i32, %c0_i32_0 : i32, i32, i32
  }
  func.func @transform_9(%arg0: i32, %arg1: i32, %arg2: memref<2xi32, #tpu.memory_space<smem>>) -> (i32, i32, i32) {
    %c0_i32 = arith.constant 0 : i32
    %c0_i32_0 = arith.constant 0 : i32
    %c0_i32_1 = arith.constant 0 : i32
    return %arg1, %c0_i32, %c0_i32_0 : i32, i32, i32
  }
  func.func @transform_10(%arg0: i32, %arg1: i32, %arg2: memref<2xi32, #tpu.memory_space<smem>>) -> (i32, i32, i32) {
    %c0_i32 = arith.constant 0 : i32
    %c0_i32_0 = arith.constant 0 : i32
    %c0_i32_1 = arith.constant 0 : i32
    return %arg1, %c0_i32, %c0_i32_0 : i32, i32, i32
  }
  func.func @transform_11(%arg0: i32, %arg1: i32, %arg2: memref<2xi32, #tpu.memory_space<smem>>) -> (i32, i32, i32) {
    %c0_i32 = arith.constant 0 : i32
    %c0_i32_0 = arith.constant 0 : i32
    %c0_i32_1 = arith.constant 0 : i32
    return %arg1, %c0_i32, %c0_i32_0 : i32, i32, i32
  }
  func.func @transform_12(%arg0: i32, %arg1: i32, %arg2: memref<2xi32, #tpu.memory_space<smem>>) -> (i32, i32, i32) {
    %c0_i32 = arith.constant 0 : i32
    %c0_i32_0 = arith.constant 0 : i32
    %c0_i32_1 = arith.constant 0 : i32
    return %arg1, %c0_i32, %c0_i32_0 : i32, i32, i32
  }
  func.func @transform_13(%arg0: i32, %arg1: i32, %arg2: memref<2xi32, #tpu.memory_space<smem>>) -> (i32, i32, i32) {
    %c0_i32 = arith.constant 0 : i32
    %c0_i32_0 = arith.constant 0 : i32
    %c0_i32_1 = arith.constant 0 : i32
    return %arg0, %c0_i32, %c0_i32_0 : i32, i32, i32
  }
}

</mosaic_0001>

<llo_original>
// kernel: tpu_custom_call.1
$region0: #{tpu_custom_call.1}
  #allocation0 [shape = 'u32[]', space=smem, size = 0x4, offset = 0x4, fixed_abs, tag = 'smem constant byte address 0x4 - core index']
  #allocation1 [shape = 'u32[144,128]{1,0:T(1,128)}', space=vmem, size = 0x12000, scoped, tag = 'internal scratch']
  #allocation2 [shape = 's32[1]{0}', space=sflag, size = 0x4, scoped, tag = 'scoped memory for tpu_custom_call.1']
  #allocation3 [shape = 'u8[512]{0}', space=smem, size = 0x200, scoped, tag = 'prefetched SMEM operand 0']
  %s0 = inlined_call_operand.hbm [shape: s32[2], index: 0, kind: input, shape index: {}]
  %s1 = inlined_call_operand.hbm [shape: f32[2,8,32], index: 1, kind: input, shape index: {}]
  %s2 = inlined_call_operand.vmem [shape: bf16[2,32,96], index: 2, kind: input, shape index: {}]
  %s3 = inlined_call_operand.vmem [shape: f32[2,1,96], index: 3, kind: input, shape index: {}]
  %s4 = inlined_call_operand.vmem [shape: bf16[2,32,32], index: 4, kind: input, shape index: {}]
  %s5 = inlined_call_operand.vmem [shape: f32[2,1,32], index: 5, kind: input, shape index: {}]
  %s6 = inlined_call_operand.vmem [shape: f32[2,1,32], index: 6, kind: input, shape index: {}]
  %s7 = inlined_call_operand.vmem [shape: f32[2,1,32], index: 7, kind: input, shape index: {}]
  %s8 = inlined_call_operand.vmem [shape: f32[2,1,32], index: 8, kind: input, shape index: {}]
  %s9 = inlined_call_operand.vmem [shape: f32[2,1,32], index: 9, kind: input, shape index: {}]
  %s10 = inlined_call_operand.vmem [shape: bf16[2,32,64], index: 10, kind: input, shape index: {}]
  %s11 = inlined_call_operand.hbm [shape: f32[2,1,64], index: 11, kind: input, shape index: {}]
  %s12 = inlined_call_operand.vmem [shape: bf16[2,64,32], index: 12, kind: input, shape index: {}]
  %s13 = inlined_call_operand.vmem [shape: f32[2,1,32], index: 13, kind: input, shape index: {}]
  %s14 = inlined_call_operand.hbm [shape: f32[2,8,32], index: 14, kind: output, shape index: {}]
  %s15 = sld [smem:[#allocation0]]
  $region97: #{tpu_custom_call.1} parent=0
    _
  %s17 = ssub.s32 1, %s15
  %s18 = scalar_select 0, %s17, %s15
  %20 = dma.hbm_to_smem %s0, 16, [#allocation3], [#allocation2]
  %21 = dma.done [#allocation2], 16
  %22 = sfence
  $region1: #{tpu_custom_call.1} parent=0
    #allocation4 [shape = 'u8[8192]{0}', space=vmem, size = 0x2000, scoped, tag = 'input window, operand 1']
    #allocation5 [shape = 's32[2]{0}', space=sflag, size = 0x8, scoped, tag = 'scoped memory for tpu_custom_call.1']
    #allocation6 [shape = 's32[2]{0}', space=sflag, size = 0x8, scoped, tag = 'scoped memory for tpu_custom_call.1']
    #allocation7 [shape = 'u8[1024]{0}', space=vmem, size = 0x400, scoped, tag = 'input window, operand 11']
    #allocation8 [shape = 's32[2]{0}', space=sflag, size = 0x8, scoped, tag = 'scoped memory for tpu_custom_call.1']
    #allocation9 [shape = 'u8[8192]{0}', space=vmem, size = 0x2000, scoped, tag = 'output window, operand 0']
    %23 = vsyncpa [#allocation5], 0
    %s24 = scalar_lea.sflag [#allocation5], 1
    %25 = vsyncpa %s24, 0
    %26 = vsyncpa [#allocation8], 0
    %s27 = scalar_lea.sflag [#allocation8], 1
    %28 = vsyncpa %s27, 0
    %29 = vsyncpa [#allocation6], 0
    %s30 = scalar_lea.sflag [#allocation6], 1
    %31 = vsyncpa %s30, 0
    loop: start=0, step=1, limit=6
    $region2: #{tpu_custom_call.1} parent=1 // loop_pre_header
      _
    $region3: #{tpu_custom_call.1} parent=1 // loop_header
      %s33 = sphi 0, %s37
      %p34 = scmp.ge.s32.totalorder %s33, 6
      %s40 = sphi 0, %s52
      %s41 = sphi 0, %s48
      %s42 = sphi 0, %s40
      %s43 = sphi 0, %s41
      %s44 = sphi 0, %s42
      %s45 = sphi 0, %s43
      %s55 = sphi 0, %s57
      %s58 = sphi 0, %s55
      %s59 = sphi 0, %s58
      %s75 = sphi 0, %s59
      %s81 = sphi 0, %s83
      %s84 = sphi 0, %s81
      %s85 = sphi 0, %s84
      %s101 = sphi 0, %s85
      %s107 = sphi 0, %s109
      %s110 = sphi 0, %s107
      %s111 = sphi 0, %s110
      %s127 = sphi 0, %s111
      %s133 = sphi 0, %s135
      %s136 = sphi 0, %s133
      %s137 = sphi 0, %s136
      %s153 = sphi 0, %s137
      %s159 = sphi 0, %s161
      %s162 = sphi 0, %s159
      %s163 = sphi 0, %s162
      %s179 = sphi 0, %s163
      %s185 = sphi 0, %s187
      %s188 = sphi 0, %s185
      %s189 = sphi 0, %s188
      %s205 = sphi 0, %s189
      %s211 = sphi 0, %s213
      %s214 = sphi 0, %s211
      %s215 = sphi 0, %s214
      %s231 = sphi 0, %s215
      %s237 = sphi 0, %s239
      %s240 = sphi 0, %s237
      %s241 = sphi 0, %s240
      %s257 = sphi 0, %s241
      %s263 = sphi 0, %s265
      %s266 = sphi 0, %s263
      %s267 = sphi 0, %s266
      %s283 = sphi 0, %s267
      %s289 = sphi 0, %s291
      %s292 = sphi 0, %s289
      %s293 = sphi 0, %s292
      %s309 = sphi 0, %s293
      %s315 = sphi 0, %s317
      %s318 = sphi 0, %s315
      %s319 = sphi 0, %s318
      %s335 = sphi 0, %s319
      %s341 = sphi 0, %s343
      %s344 = sphi 0, %s341
      %s345 = sphi 0, %s344
      %s361 = sphi 0, %s345
      %s367 = sphi 0, %s369
      %s370 = sphi 0, %s367
      %s371 = sphi 0, %s370
      %s387 = sphi 0, %s371
      %s393 = sphi 0, %s395
      %s396 = sphi 0, %s393
      %s397 = sphi 0, %s396
      %s413 = sphi 0, %s397
    $region4: #{tpu_custom_call.1} parent=1 // loop_header_branch
      %36 = sbr.rel (%p34) target = $region8
    $region5: #{tpu_custom_call.1} parent=1 // loop_body
      %s38 = ssub.s32 %s33, 1
      %s39 = ssub.s32 %s33, 2
      %s46 = sadd.s32 1, %s41
      %p47 = scmp.ge.s32.totalorder %s46, 2
      %s48 = scalar_select %p47, 0, %s46
      %s49 = sadd.s32 1, %s40
      %s50 = scalar_select %p47, %s49, %s40
      %p51 = scmp.ge.s32.totalorder %s50, 2
      %s52 = scalar_select %p51, 0, %s50
      %s53 = ssub.s32 %s40, %s52
      %p54 = scmp.eq.s32.totalorder %s53, 0
      %s56 = sadd.s32 %s55, 1
      %s57 = scalar_select %p54, %s55, %s56
      %p60 = pneg %p54
      %p61 = scmp.eq.s32.totalorder %s33, 3
      %p62 = por %p60, %p61
      %p63 = scmp.ne.s32.totalorder %s55, %s58
      %p64 = scmp.eq.s32.totalorder %s33, 0
      %p65 = por %p63, %p64
      %p66 = scmp.ne.s32.totalorder %s55, %s58
      %p67 = scmp.eq.s32.totalorder %s38, 3
      %p68 = por %p66, %p67
      %p69 = scmp.ne.s32.totalorder %s58, %s59
      %p70 = scmp.eq.s32.totalorder %s38, 0
      %p71 = por %p69, %p70
      %p72 = scmp.ne.s32.totalorder %s58, %s59
      %p73 = scmp.eq.s32.totalorder %s39, 3
      %p74 = por %p72, %p73
      %p76 = scmp.ne.s32.totalorder %s59, %s75
      %p77 = scmp.eq.s32.totalorder %s39, 0
      %p78 = por %p76, %p77
      %s79 = ssub.s32 %s41, %s48
      %p80 = scmp.eq.s32.totalorder %s79, 0
      %s82 = sadd.s32 %s81, 1
      %s83 = scalar_select %p80, %s81, %s82
      %p86 = pneg %p80
      %p87 = scmp.eq.s32.totalorder %s33, 3
      %p88 = por %p86, %p87
      %p89 = scmp.ne.s32.totalorder %s81, %s84
      %p90 = scmp.eq.s32.totalorder %s33, 0
      %p91 = por %p89, %p90
      %p92 = scmp.ne.s32.totalorder %s81, %s84
      %p93 = scmp.eq.s32.totalorder %s38, 3
      %p94 = por %p92, %p93
      %p95 = scmp.ne.s32.totalorder %s84, %s85
      %p96 = scmp.eq.s32.totalorder %s38, 0
      %p97 = por %p95, %p96
      %p98 = scmp.ne.s32.totalorder %s84, %s85
      %p99 = scmp.eq.s32.totalorder %s39, 3
      %p100 = por %p98, %p99
      %p102 = scmp.ne.s32.totalorder %s85, %s101
      %p103 = scmp.eq.s32.totalorder %s39, 0
      %p104 = por %p102, %p103
      %s105 = ssub.s32 %s41, %s48
      %p106 = scmp.eq.s32.totalorder %s105, 0
      %s108 = sadd.s32 %s107, 1
      %s109 = scalar_select %p106, %s107, %s108
      %p112 = pneg %p106
      %p113 = scmp.eq.s32.totalorder %s33, 3
      %p114 = por %p112, %p113
      %p115 = scmp.ne.s32.totalorder %s107, %s110
      %p116 = scmp.eq.s32.totalorder %s33, 0
      %p117 = por %p115, %p116
      %p118 = scmp.ne.s32.totalorder %s107, %s110
      %p119 = scmp.eq.s32.totalorder %s38, 3
      %p120 = por %p118, %p119
      %p121 = scmp.ne.s32.totalorder %s110, %s111
      %p122 = scmp.eq.s32.totalorder %s38, 0
      %p123 = por %p121, %p122
      %p124 = scmp.ne.s32.totalorder %s110, %s111
      %p125 = scmp.eq.s32.totalorder %s39, 3
      %p126 = por %p124, %p125
      %p128 = scmp.ne.s32.totalorder %s111, %s127
      %p129 = scmp.eq.s32.totalorder %s39, 0
      %p130 = por %p128, %p129
      %s131 = ssub.s32 %s41, %s48
      %p132 = scmp.eq.s32.totalorder %s131, 0
      %s134 = sadd.s32 %s133, 1
      %s135 = scalar_select %p132, %s133, %s134
      %p138 = pneg %p132
      %p139 = scmp.eq.s32.totalorder %s33, 3
      %p140 = por %p138, %p139
      %p141 = scmp.ne.s32.totalorder %s133, %s136
      %p142 = scmp.eq.s32.totalorder %s33, 0
      %p143 = por %p141, %p142
      %p144 = scmp.ne.s32.totalorder %s133, %s136
      %p145 = scmp.eq.s32.totalorder %s38, 3
      %p146 = por %p144, %p145
      %p147 = scmp.ne.s32.totalorder %s136, %s137
      %p148 = scmp.eq.s32.totalorder %s38, 0
      %p149 = por %p147, %p148
      %p150 = scmp.ne.s32.totalorder %s136, %s137
      %p151 = scmp.eq.s32.totalorder %s39, 3
      %p152 = por %p150, %p151
      %p154 = scmp.ne.s32.totalorder %s137, %s153
      %p155 = scmp.eq.s32.totalorder %s39, 0
      %p156 = por %p154, %p155
      %s157 = ssub.s32 %s41, %s48
      %p158 = scmp.eq.s32.totalorder %s157, 0
      %s160 = sadd.s32 %s159, 1
      %s161 = scalar_select %p158, %s159, %s160
      %p164 = pneg %p158
      %p165 = scmp.eq.s32.totalorder %s33, 3
      %p166 = por %p164, %p165
      %p167 = scmp.ne.s32.totalorder %s159, %s162
      %p168 = scmp.eq.s32.totalorder %s33, 0
      %p169 = por %p167, %p168
      %p170 = scmp.ne.s32.totalorder %s159, %s162
      %p171 = scmp.eq.s32.totalorder %s38, 3
      %p172 = por %p170, %p171
      %p173 = scmp.ne.s32.totalorder %s162, %s163
      %p174 = scmp.eq.s32.totalorder %s38, 0
      %p175 = por %p173, %p174
      %p176 = scmp.ne.s32.totalorder %s162, %s163
      %p177 = scmp.eq.s32.totalorder %s39, 3
      %p178 = por %p176, %p177
      %p180 = scmp.ne.s32.totalorder %s163, %s179
      %p181 = scmp.eq.s32.totalorder %s39, 0
      %p182 = por %p180, %p181
      %s183 = ssub.s32 %s41, %s48
      %p184 = scmp.eq.s32.totalorder %s183, 0
      %s186 = sadd.s32 %s185, 1
      %s187 = scalar_select %p184, %s185, %s186
      %p190 = pneg %p184
      %p191 = scmp.eq.s32.totalorder %s33, 3
      %p192 = por %p190, %p191
      %p193 = scmp.ne.s32.totalorder %s185, %s188
      %p194 = scmp.eq.s32.totalorder %s33, 0
      %p195 = por %p193, %p194
      %p196 = scmp.ne.s32.totalorder %s185, %s188
      %p197 = scmp.eq.s32.totalorder %s38, 3
      %p198 = por %p196, %p197
      %p199 = scmp.ne.s32.totalorder %s188, %s189
      %p200 = scmp.eq.s32.totalorder %s38, 0
      %p201 = por %p199, %p200
      %p202 = scmp.ne.s32.totalorder %s188, %s189
      %p203 = scmp.eq.s32.totalorder %s39, 3
      %p204 = por %p202, %p203
      %p206 = scmp.ne.s32.totalorder %s189, %s205
      %p207 = scmp.eq.s32.totalorder %s39, 0
      %p208 = por %p206, %p207
      %s209 = ssub.s32 %s41, %s48
      %p210 = scmp.eq.s32.totalorder %s209, 0
      %s212 = sadd.s32 %s211, 1
      %s213 = scalar_select %p210, %s211, %s212
      %p216 = pneg %p210
      %p217 = scmp.eq.s32.totalorder %s33, 3
      %p218 = por %p216, %p217
      %p219 = scmp.ne.s32.totalorder %s211, %s214
      %p220 = scmp.eq.s32.totalorder %s33, 0
      %p221 = por %p219, %p220
      %p222 = scmp.ne.s32.totalorder %s211, %s214
      %p223 = scmp.eq.s32.totalorder %s38, 3
      %p224 = por %p222, %p223
      %p225 = scmp.ne.s32.totalorder %s214, %s215
      %p226 = scmp.eq.s32.totalorder %s38, 0
      %p227 = por %p225, %p226
      %p228 = scmp.ne.s32.totalorder %s214, %s215
      %p229 = scmp.eq.s32.totalorder %s39, 3
      %p230 = por %p228, %p229
      %p232 = scmp.ne.s32.totalorder %s215, %s231
      %p233 = scmp.eq.s32.totalorder %s39, 0
      %p234 = por %p232, %p233
      %s235 = ssub.s32 %s41, %s48
      %p236 = scmp.eq.s32.totalorder %s235, 0
      %s238 = sadd.s32 %s237, 1
      %s239 = scalar_select %p236, %s237, %s238
      %p242 = pneg %p236
      %p243 = scmp.eq.s32.totalorder %s33, 3
      %p244 = por %p242, %p243
      %p245 = scmp.ne.s32.totalorder %s237, %s240
      %p246 = scmp.eq.s32.totalorder %s33, 0
      %p247 = por %p245, %p246
      %p248 = scmp.ne.s32.totalorder %s237, %s240
      %p249 = scmp.eq.s32.totalorder %s38, 3
      %p250 = por %p248, %p249
      %p251 = scmp.ne.s32.totalorder %s240, %s241
      %p252 = scmp.eq.s32.totalorder %s38, 0
      %p253 = por %p251, %p252
      %p254 = scmp.ne.s32.totalorder %s240, %s241
      %p255 = scmp.eq.s32.totalorder %s39, 3
      %p256 = por %p254, %p255
      %p258 = scmp.ne.s32.totalorder %s241, %s257
      %p259 = scmp.eq.s32.totalorder %s39, 0
      %p260 = por %p258, %p259
      %s261 = ssub.s32 %s41, %s48
      %p262 = scmp.eq.s32.totalorder %s261, 0
      %s264 = sadd.s32 %s263, 1
      %s265 = scalar_select %p262, %s263, %s264
      %p268 = pneg %p262
      %p269 = scmp.eq.s32.totalorder %s33, 3
      %p270 = por %p268, %p269
      %p271 = scmp.ne.s32.totalorder %s263, %s266
      %p272 = scmp.eq.s32.totalorder %s33, 0
      %p273 = por %p271, %p272
      %p274 = scmp.ne.s32.totalorder %s263, %s266
      %p275 = scmp.eq.s32.totalorder %s38, 3
      %p276 = por %p274, %p275
      %p277 = scmp.ne.s32.totalorder %s266, %s267
      %p278 = scmp.eq.s32.totalorder %s38, 0
      %p279 = por %p277, %p278
      %p280 = scmp.ne.s32.totalorder %s266, %s267
      %p281 = scmp.eq.s32.totalorder %s39, 3
      %p282 = por %p280, %p281
      %p284 = scmp.ne.s32.totalorder %s267, %s283
      %p285 = scmp.eq.s32.totalorder %s39, 0
      %p286 = por %p284, %p285
      %s287 = ssub.s32 %s41, %s48
      %p288 = scmp.eq.s32.totalorder %s287, 0
      %s290 = sadd.s32 %s289, 1
      %s291 = scalar_select %p288, %s289, %s290
      %p294 = pneg %p288
      %p295 = scmp.eq.s32.totalorder %s33, 3
      %p296 = por %p294, %p295
      %p297 = scmp.ne.s32.totalorder %s289, %s292
      %p298 = scmp.eq.s32.totalorder %s33, 0
      %p299 = por %p297, %p298
      %p300 = scmp.ne.s32.totalorder %s289, %s292
      %p301 = scmp.eq.s32.totalorder %s38, 3
      %p302 = por %p300, %p301
      %p303 = scmp.ne.s32.totalorder %s292, %s293
      %p304 = scmp.eq.s32.totalorder %s38, 0
      %p305 = por %p303, %p304
      %p306 = scmp.ne.s32.totalorder %s292, %s293
      %p307 = scmp.eq.s32.totalorder %s39, 3
      %p308 = por %p306, %p307
      %p310 = scmp.ne.s32.totalorder %s293, %s309
      %p311 = scmp.eq.s32.totalorder %s39, 0
      %p312 = por %p310, %p311
      %s313 = ssub.s32 %s41, %s48
      %p314 = scmp.eq.s32.totalorder %s313, 0
      %s316 = sadd.s32 %s315, 1
      %s317 = scalar_select %p314, %s315, %s316
      %p320 = pneg %p314
      %p321 = scmp.eq.s32.totalorder %s33, 3
      %p322 = por %p320, %p321
      %p323 = scmp.ne.s32.totalorder %s315, %s318
      %p324 = scmp.eq.s32.totalorder %s33, 0
      %p325 = por %p323, %p324
      %p326 = scmp.ne.s32.totalorder %s315, %s318
      %p327 = scmp.eq.s32.totalorder %s38, 3
      %p328 = por %p326, %p327
      %p329 = scmp.ne.s32.totalorder %s318, %s319
      %p330 = scmp.eq.s32.totalorder %s38, 0
      %p331 = por %p329, %p330
      %p332 = scmp.ne.s32.totalorder %s318, %s319
      %p333 = scmp.eq.s32.totalorder %s39, 3
      %p334 = por %p332, %p333
      %p336 = scmp.ne.s32.totalorder %s319, %s335
      %p337 = scmp.eq.s32.totalorder %s39, 0
      %p338 = por %p336, %p337
      %s339 = ssub.s32 %s41, %s48
      %p340 = scmp.eq.s32.totalorder %s339, 0
      %s342 = sadd.s32 %s341, 1
      %s343 = scalar_select %p340, %s341, %s342
      %p346 = pneg %p340
      %p347 = scmp.eq.s32.totalorder %s33, 3
      %p348 = por %p346, %p347
      %p349 = scmp.ne.s32.totalorder %s341, %s344
      %p350 = scmp.eq.s32.totalorder %s33, 0
      %p351 = por %p349, %p350
      %p352 = scmp.ne.s32.totalorder %s341, %s344
      %p353 = scmp.eq.s32.totalorder %s38, 3
      %p354 = por %p352, %p353
      %p355 = scmp.ne.s32.totalorder %s344, %s345
      %p356 = scmp.eq.s32.totalorder %s38, 0
      %p357 = por %p355, %p356
      %p358 = scmp.ne.s32.totalorder %s344, %s345
      %p359 = scmp.eq.s32.totalorder %s39, 3
      %p360 = por %p358, %p359
      %p362 = scmp.ne.s32.totalorder %s345, %s361
      %p363 = scmp.eq.s32.totalorder %s39, 0
      %p364 = por %p362, %p363
      %s365 = ssub.s32 %s41, %s48
      %p366 = scmp.eq.s32.totalorder %s365, 0
      %s368 = sadd.s32 %s367, 1
      %s369 = scalar_select %p366, %s367, %s368
      %p372 = pneg %p366
      %p373 = scmp.eq.s32.totalorder %s33, 3
      %p374 = por %p372, %p373
      %p375 = scmp.ne.s32.totalorder %s367, %s370
      %p376 = scmp.eq.s32.totalorder %s33, 0
      %p377 = por %p375, %p376
      %p378 = scmp.ne.s32.totalorder %s367, %s370
      %p379 = scmp.eq.s32.totalorder %s38, 3
      %p380 = por %p378, %p379
      %p381 = scmp.ne.s32.totalorder %s370, %s371
      %p382 = scmp.eq.s32.totalorder %s38, 0
      %p383 = por %p381, %p382
      %p384 = scmp.ne.s32.totalorder %s370, %s371
      %p385 = scmp.eq.s32.totalorder %s39, 3
      %p386 = por %p384, %p385
      %p388 = scmp.ne.s32.totalorder %s371, %s387
      %p389 = scmp.eq.s32.totalorder %s39, 0
      %p390 = por %p388, %p389
      %s391 = ssub.s32 %s40, %s52
      %p392 = scmp.eq.s32.totalorder %s391, 0
      %s394 = sadd.s32 %s393, 1
      %s395 = scalar_select %p392, %s393, %s394
      %p398 = pneg %p392
      %p399 = scmp.eq.s32.totalorder %s33, 3
      %p400 = por %p398, %p399
      %p401 = scmp.ne.s32.totalorder %s393, %s396
      %p402 = scmp.eq.s32.totalorder %s33, 0
      %p403 = por %p401, %p402
      %p404 = scmp.ne.s32.totalorder %s393, %s396
      %p405 = scmp.eq.s32.totalorder %s38, 3
      %p406 = por %p404, %p405
      %p407 = scmp.ne.s32.totalorder %s396, %s397
      %p408 = scmp.eq.s32.totalorder %s38, 0
      %p409 = por %p407, %p408
      %p410 = scmp.ne.s32.totalorder %s396, %s397
      %p411 = scmp.eq.s32.totalorder %s39, 3
      %p412 = por %p410, %p411
      %p414 = scmp.ne.s32.totalorder %s397, %s413
      %p415 = scmp.eq.s32.totalorder %s39, 0
      %p416 = por %p414, %p415
      %p417 = scmp.le.s32.totalorder 1, %s33
      %p418 = scmp.lt.s32.totalorder %s33, 5
      %p419 = pnand %p417, %p418
      %p420 = pneg %p419
      // Predicated region
      $region9: #{tpu_custom_call.1} parent=5 // pred_check
        _
      $region10: #{tpu_custom_call.1} parent=5 // pred_check_branch
        %422 = sbr.rel (%p419) target = $region12
      $region11: #{tpu_custom_call.1} parent=5 // pred_region
        %s423 = ssub.s32 %s33, 1
      $region12: #{tpu_custom_call.1} parent=5 // pred_fallthru
        _
      %p424 = scmp.lt.s32.totalorder %s33, 4
      // Predicated region
      $region13: #{tpu_custom_call.1} parent=5 // pred_check
        %p425 = pneg %p424
      $region14: #{tpu_custom_call.1} parent=5 // pred_check_branch
        %427 = sbr.rel (%p425) target = $region16
      $region15: #{tpu_custom_call.1} parent=5 // pred_region
        // Predicated region
        $region17: #{tpu_custom_call.1} parent=15 // pred_check
          %p428 = pneg %p65
        $region18: #{tpu_custom_call.1} parent=15 // pred_check_branch
          %430 = sbr.rel (%p428) target = $region20
        $region19: #{tpu_custom_call.1} parent=15 // pred_region
          %s431 = sand.u32 %s55, 1
          %s432 = scalar_lea.sflag [#allocation5], %s431
          %s433 = sand.u32 %s55, 1
          %s434 = smul.addr %s433, 8
          %s435 = scalar_lea.vmem [#allocation4], %s434
          %s437 = ssub.s32 128, 128
          %438 = vsyncadd %s432, %s437
          %s439 = smul.addr %s40, 128
          %s440 = scalar_lea.hbm %s1, %s439
          %s442 = sshll.u32 %s435, 4
          %s443 = int_to_ptr.vmem [resolvable:$true] %s442
          %445 = dma.hbm_to_vmem [thread:$0]  %s440, 128, %s443, %s432
        $region20: #{tpu_custom_call.1} parent=15 // pred_fallthru
          _
        // Predicated region
        $region21: #{tpu_custom_call.1} parent=15 // pred_check
          %p446 = pneg %p91
        $region22: #{tpu_custom_call.1} parent=15 // pred_check_branch
          %448 = sbr.rel (%p446) target = $region24
        $region23: #{tpu_custom_call.1} parent=15 // pred_region
          %p449 = scmp.lt.s32.totalorder %s41, 1
          %s450 = scalar_select %p449, %s41, 1
          %s451 = smul.addr %s450, 4
          %s452 = smul.addr %s451, 4
          %s453 = scalar_lea.vmem %s2, %s452
        $region24: #{tpu_custom_call.1} parent=15 // pred_fallthru
          _
        // Predicated region
        $region25: #{tpu_custom_call.1} parent=15 // pred_check
          %p454 = pneg %p117
        $region26: #{tpu_custom_call.1} parent=15 // pred_check_branch
          %456 = sbr.rel (%p454) target = $region28
        $region27: #{tpu_custom_call.1} parent=15 // pred_region
          %p457 = scmp.lt.s32.totalorder %s41, 1
          %s458 = scalar_select %p457, %s41, 1
          %s459 = scalar_lea.vmem %s3, %s458
        $region28: #{tpu_custom_call.1} parent=15 // pred_fallthru
          _
        // Predicated region
        $region29: #{tpu_custom_call.1} parent=15 // pred_check
          %p460 = pneg %p143
        $region30: #{tpu_custom_call.1} parent=15 // pred_check_branch
          %462 = sbr.rel (%p460) target = $region32
        $region31: #{tpu_custom_call.1} parent=15 // pred_region
          %p463 = scmp.lt.s32.totalorder %s41, 1
          %s464 = scalar_select %p463, %s41, 1
          %s465 = smul.addr %s464, 4
          %s466 = smul.addr %s465, 4
          %s467 = scalar_lea.vmem %s4, %s466
        $region32: #{tpu_custom_call.1} parent=15 // pred_fallthru
          _
        // Predicated region
        $region33: #{tpu_custom_call.1} parent=15 // pred_check
          %p468 = pneg %p169
        $region34: #{tpu_custom_call.1} parent=15 // pred_check_branch
          %470 = sbr.rel (%p468) target = $region36
        $region35: #{tpu_custom_call.1} parent=15 // pred_region
          %p471 = scmp.lt.s32.totalorder %s41, 1
          %s472 = scalar_select %p471, %s41, 1
          %s473 = scalar_lea.vmem %s5, %s472
        $region36: #{tpu_custom_call.1} parent=15 // pred_fallthru
          _
        // Predicated region
        $region37: #{tpu_custom_call.1} parent=15 // pred_check
          %p474 = pneg %p195
        $region38: #{tpu_custom_call.1} parent=15 // pred_check_branch
          %476 = sbr.rel (%p474) target = $region40
        $region39: #{tpu_custom_call.1} parent=15 // pred_region
          %p477 = scmp.lt.s32.totalorder %s41, 1
          %s478 = scalar_select %p477, %s41, 1
          %s479 = scalar_lea.vmem %s6, %s478
        $region40: #{tpu_custom_call.1} parent=15 // pred_fallthru
          _
        // Predicated region
        $region41: #{tpu_custom_call.1} parent=15 // pred_check
          %p480 = pneg %p221
        $region42: #{tpu_custom_call.1} parent=15 // pred_check_branch
          %482 = sbr.rel (%p480) target = $region44
        $region43: #{tpu_custom_call.1} parent=15 // pred_region
          %p483 = scmp.lt.s32.totalorder %s41, 1
          %s484 = scalar_select %p483, %s41, 1
          %s485 = scalar_lea.vmem %s7, %s484
        $region44: #{tpu_custom_call.1} parent=15 // pred_fallthru
          _
        // Predicated region
        $region45: #{tpu_custom_call.1} parent=15 // pred_check
          %p486 = pneg %p247
        $region46: #{tpu_custom_call.1} parent=15 // pred_check_branch
          %488 = sbr.rel (%p486) target = $region48
        $region47: #{tpu_custom_call.1} parent=15 // pred_region
          %p489 = scmp.lt.s32.totalorder %s41, 1
          %s490 = scalar_select %p489, %s41, 1
          %s491 = scalar_lea.vmem %s8, %s490
        $region48: #{tpu_custom_call.1} parent=15 // pred_fallthru
          _
        // Predicated region
        $region49: #{tpu_custom_call.1} parent=15 // pred_check
          %p492 = pneg %p273
        $region50: #{tpu_custom_call.1} parent=15 // pred_check_branch
          %494 = sbr.rel (%p492) target = $region52
        $region51: #{tpu_custom_call.1} parent=15 // pred_region
          %p495 = scmp.lt.s32.totalorder %s41, 1
          %s496 = scalar_select %p495, %s41, 1
          %s497 = scalar_lea.vmem %s9, %s496
        $region52: #{tpu_custom_call.1} parent=15 // pred_fallthru
          _
        // Predicated region
        $region53: #{tpu_custom_call.1} parent=15 // pred_check
          %p498 = pneg %p299
        $region54: #{tpu_custom_call.1} parent=15 // pred_check_branch
          %500 = sbr.rel (%p498) target = $region56
        $region55: #{tpu_custom_call.1} parent=15 // pred_region
          %p501 = scmp.lt.s32.totalorder %s41, 1
          %s502 = scalar_select %p501, %s41, 1
          %s503 = smul.addr %s502, 4
          %s504 = smul.addr %s503, 4
          %s505 = scalar_lea.vmem %s10, %s504
        $region56: #{tpu_custom_call.1} parent=15 // pred_fallthru
          _
        // Predicated region
        $region57: #{tpu_custom_call.1} parent=15 // pred_check
          %p506 = pneg %p325
        $region58: #{tpu_custom_call.1} parent=15 // pred_check_branch
          %508 = sbr.rel (%p506) target = $region60
        $region59: #{tpu_custom_call.1} parent=15 // pred_region
          %s509 = sand.u32 %s315, 1
          %s510 = scalar_lea.sflag [#allocation8], %s509
          %s511 = sand.u32 %s315, 1
          %s512 = scalar_lea.vmem [#allocation7], %s511
          %s514 = ssub.s32 16, 16
          %515 = vsyncadd %s510, %s514
          %s516 = smul.addr %s41, 16
          %s517 = scalar_lea.hbm %s11, %s516
          %s519 = sshll.u32 %s512, 4
          %s520 = int_to_ptr.vmem [resolvable:$true] %s519
          %522 = dma.hbm_to_vmem [thread:$0]  %s517, 16, %s520, %s510
        $region60: #{tpu_custom_call.1} parent=15 // pred_fallthru
          _
        // Predicated region
        $region61: #{tpu_custom_call.1} parent=15 // pred_check
          %p523 = pneg %p351
        $region62: #{tpu_custom_call.1} parent=15 // pred_check_branch
          %525 = sbr.rel (%p523) target = $region64
        $region63: #{tpu_custom_call.1} parent=15 // pred_region
          %p526 = scmp.lt.s32.totalorder %s41, 1
          %s527 = scalar_select %p526, %s41, 1
          %s528 = smul.addr %s527, 8
          %s529 = smul.addr %s528, 4
          %s530 = scalar_lea.vmem %s12, %s529
        $region64: #{tpu_custom_call.1} parent=15 // pred_fallthru
          _
        // Predicated region
        $region65: #{tpu_custom_call.1} parent=15 // pred_check
          %p531 = pneg %p377
        $region66: #{tpu_custom_call.1} parent=15 // pred_check_branch
          %533 = sbr.rel (%p531) target = $region68
        $region67: #{tpu_custom_call.1} parent=15 // pred_region
          %p534 = scmp.lt.s32.totalorder %s41, 1
          %s535 = scalar_select %p534, %s41, 1
          %s536 = scalar_lea.vmem %s13, %s535
        $region68: #{tpu_custom_call.1} parent=15 // pred_fallthru
          _
      $region16: #{tpu_custom_call.1} parent=5 // pred_fallthru
        _
      %p537 = scmp.le.s32.totalorder 1, %s33
      %p538 = scmp.lt.s32.totalorder %s33, 5
      %p539 = pnand %p537, %p538
      %p540 = pneg %p539
      // Predicated region
      $region69: #{tpu_custom_call.1} parent=5 // pred_check
        _
      $region70: #{tpu_custom_call.1} parent=5 // pred_check_branch
        %542 = sbr.rel (%p539) target = $region72
      $region71: #{tpu_custom_call.1} parent=5 // pred_region
        %s543 = ssub.s32 %s33, 1
        %s544 = sand.u32 %s58, 1
        %s545 = scalar_lea.sflag [#allocation5], %s544
        %s546 = sand.u32 %s58, 1
        %s547 = smul.addr %s546, 8
        %s548 = scalar_lea.vmem [#allocation4], %s547
        // Predicated region
        $region73: #{tpu_custom_call.1} parent=71 // pred_check
          %p549 = pneg %p71
        $region74: #{tpu_custom_call.1} parent=71 // pred_check_branch
          %551 = sbr.rel (%p549) target = $region76
        $region75: #{tpu_custom_call.1} parent=71 // pred_region
          %552 = dma.done %s545, 128
        $region76: #{tpu_custom_call.1} parent=71 // pred_fallthru
          _
        %s553 = sand.u32 %s318, 1
        %s554 = scalar_lea.sflag [#allocation8], %s553
        %s555 = sand.u32 %s318, 1
        %s556 = scalar_lea.vmem [#allocation7], %s555
        // Predicated region
        $region77: #{tpu_custom_call.1} parent=71 // pred_check
          %p557 = pneg %p331
        $region78: #{tpu_custom_call.1} parent=71 // pred_check_branch
          %559 = sbr.rel (%p557) target = $region80
        $region79: #{tpu_custom_call.1} parent=71 // pred_region
          %560 = dma.done %s554, 16
        $region80: #{tpu_custom_call.1} parent=71 // pred_fallthru
          _
        %s561 = sand.u32 %s58, 1
        %s562 = scalar_lea.sflag [#allocation5], %s561
        %s563 = sand.u32 %s58, 1
        %s564 = smul.addr %s563, 8
        %s565 = scalar_lea.vmem [#allocation4], %s564
        %p566 = pneg %p71
        %p567 = pneg %p68
        %p568 = scmp.lt.s32.totalorder %s43, 1
        %s569 = scalar_select %p568, %s43, 1
        %s570 = smul.addr %s569, 4
        %s571 = smul.addr %s570, 4
        %s572 = scalar_lea.vmem %s2, %s571
        %p573 = pneg %p97
        %p574 = pneg %p94
        %p575 = scmp.lt.s32.totalorder %s43, 1
        %s576 = scalar_select %p575, %s43, 1
        %s577 = scalar_lea.vmem %s3, %s576
        %p578 = pneg %p123
        %p579 = pneg %p120
        %p580 = scmp.lt.s32.totalorder %s43, 1
        %s581 = scalar_select %p580, %s43, 1
        %s582 = smul.addr %s581, 4
        %s583 = smul.addr %s582, 4
        %s584 = scalar_lea.vmem %s4, %s583
        %p585 = pneg %p149
        %p586 = pneg %p146
        %p587 = scmp.lt.s32.totalorder %s43, 1
        %s588 = scalar_select %p587, %s43, 1
        %s589 = scalar_lea.vmem %s5, %s588
        %p590 = pneg %p175
        %p591 = pneg %p172
        %p592 = scmp.lt.s32.totalorder %s43, 1
        %s593 = scalar_select %p592, %s43, 1
        %s594 = scalar_lea.vmem %s6, %s593
        %p595 = pneg %p201
        %p596 = pneg %p198
        %p597 = scmp.lt.s32.totalorder %s43, 1
        %s598 = scalar_select %p597, %s43, 1
        %s599 = scalar_lea.vmem %s7, %s598
        %p600 = pneg %p227
        %p601 = pneg %p224
        %p602 = scmp.lt.s32.totalorder %s43, 1
        %s603 = scalar_select %p602, %s43, 1
        %s604 = scalar_lea.vmem %s8, %s603
        %p605 = pneg %p253
        %p606 = pneg %p250
        %p607 = scmp.lt.s32.totalorder %s43, 1
        %s608 = scalar_select %p607, %s43, 1
        %s609 = scalar_lea.vmem %s9, %s608
        %p610 = pneg %p279
        %p611 = pneg %p276
        %p612 = scmp.lt.s32.totalorder %s43, 1
        %s613 = scalar_select %p612, %s43, 1
        %s614 = smul.addr %s613, 4
        %s615 = smul.addr %s614, 4
        %s616 = scalar_lea.vmem %s10, %s615
        %p617 = pneg %p305
        %p618 = pneg %p302
        %s619 = sand.u32 %s318, 1
        %s620 = scalar_lea.sflag [#allocation8], %s619
        %s621 = sand.u32 %s318, 1
        %s622 = scalar_lea.vmem [#allocation7], %s621
        %p623 = pneg %p331
        %p624 = pneg %p328
        %p625 = scmp.lt.s32.totalorder %s43, 1
        %s626 = scalar_select %p625, %s43, 1
        %s627 = smul.addr %s626, 8
        %s628 = smul.addr %s627, 4
        %s629 = scalar_lea.vmem %s12, %s628
        %p630 = pneg %p357
        %p631 = pneg %p354
        %p632 = scmp.lt.s32.totalorder %s43, 1
        %s633 = scalar_select %p632, %s43, 1
        %s634 = scalar_lea.vmem %s13, %s633
        %p635 = pneg %p383
        %p636 = pneg %p380
        %p637 = pneg %p409
        %p638 = pneg %p406
        %s639 = sand.u32 %s396, 1
        %s640 = scalar_lea.sflag [#allocation6], %s639
        %s641 = sand.u32 %s396, 1
        %s642 = smul.addr %s641, 8
        %s643 = scalar_lea.vmem [#allocation9], %s642
        %p644 = scmp.lt.s32.totalorder %s43, 1
        %s645 = scalar_select %p644, %s43, 1
        %s646 = smul.addr %s645, 4
        %s647 = smul.addr %s646, 4
        %s648 = scalar_lea.vmem %s2, %s647
        %p649 = scmp.lt.s32.totalorder %s43, 1
        %s650 = scalar_select %p649, %s43, 1
        %s651 = scalar_lea.vmem %s3, %s650
        %p652 = scmp.lt.s32.totalorder %s43, 1
        %s653 = scalar_select %p652, %s43, 1
        %s654 = smul.addr %s653, 4
        %s655 = smul.addr %s654, 4
        %s656 = scalar_lea.vmem %s4, %s655
        %p657 = scmp.lt.s32.totalorder %s43, 1
        %s658 = scalar_select %p657, %s43, 1
        %s659 = scalar_lea.vmem %s5, %s658
        %p660 = scmp.lt.s32.totalorder %s43, 1
        %s661 = scalar_select %p660, %s43, 1
        %s662 = scalar_lea.vmem %s6, %s661
        %p663 = scmp.lt.s32.totalorder %s43, 1
        %s664 = scalar_select %p663, %s43, 1
        %s665 = scalar_lea.vmem %s7, %s664
        %p666 = scmp.lt.s32.totalorder %s43, 1
        %s667 = scalar_select %p666, %s43, 1
        %s668 = scalar_lea.vmem %s8, %s667
        %p669 = scmp.lt.s32.totalorder %s43, 1
        %s670 = scalar_select %p669, %s43, 1
        %s671 = scalar_lea.vmem %s9, %s670
        %p672 = scmp.lt.s32.totalorder %s43, 1
        %s673 = scalar_select %p672, %s43, 1
        %s674 = smul.addr %s673, 4
        %s675 = smul.addr %s674, 4
        %s676 = scalar_lea.vmem %s10, %s675
        %p677 = scmp.lt.s32.totalorder %s43, 1
        %s678 = scalar_select %p677, %s43, 1
        %s679 = smul.addr %s678, 8
        %s680 = smul.addr %s679, 4
        %s681 = scalar_lea.vmem %s12, %s680
        %p682 = scmp.lt.s32.totalorder %s43, 1
        %s683 = scalar_select %p682, %s43, 1
        %s684 = scalar_lea.vmem %s13, %s683
        %p686 = scmp.eq.s32.totalorder %s43, 0
        // Predicated region
        $region81: #{tpu_custom_call.1} parent=71 // pred_check
          %p687 = pneg %p686
        $region82: #{tpu_custom_call.1} parent=71 // pred_check_branch
          %689 = sbr.rel (%p687) target = $region84
        $region83: #{tpu_custom_call.1} parent=71 // pred_region
          %v690 = vld [vmem:[%s548] sm:$0xff]
          %vm691 = vcmask 261120
          %692 = vst.msk [vmem:[%s643] sm:$0xff] %vm691, %v690
        $region84: #{tpu_custom_call.1} parent=71 // pred_fallthru
          _
        %v693 = vld [vmem:[%s643] sm:$0xff]
        %s694 = sld [smem:[#allocation3 + %s42]]
        %v695 = vpack.c.bf16 %v693, %v693
        %v696 = vld [vmem:[%s648] sm:$0xf]
        %v697 = vld [vmem:[%s648 + $0x4] sm:$0xf]
        %v698 = vld [vmem:[%s648 + $0x8] sm:$0xf]
        %v699 = vld [vmem:[%s648 + $0xc] sm:$0xf]
        %v700 = vld [vmem:[%s651] sm:$0x1]
        %v702 = vlaneseq
        %v703 = vshrl.u32 %v702, 7
        %v704 = vsub.s32 0, %v703
        %v705 = vrot.slane %v700, %v704
        %v711 = vunpack.c.l.b16 %v696
        %v712 = vunpack.c.l.b16 %v697
        %v713 = vunpack.c.l.b16 %v698
        %v714 = vunpack.c.l.b16 %v699
        %v715 = vpack.c.b16 %v712, %v711
        %v716 = vpack.c.b16 %v714, %v713
        %vm719 = vcmask 261120
        %v721 = vsel %vm719, %v695, 0
        %723 = vmatprep.subr.bf16.mxu0 0
        %724 = vmatpush1.bf16.msra.mxu0 %v715
        %725 = vmatprep.subr.bf16.mxu0 0
        %726 = vmatpush1.bf16.msra.mxu0 %v716
        %727 = vmatprep.subr.bf16.mxu0 0
        %728 = vmatpush1.bf16.msra.mxu0 0
        %729 = vmatprep.subr.bf16.mxu0 0
        %730 = vmatpush1.bf16.msra.mxu0 0
        %731 = vmatprep.subr.bf16.mxu0 0
        %732 = vmatpush1.bf16.msra.mxu0 0
        %733 = vmatprep.subr.bf16.mxu0 0
        %734 = vmatpush1.bf16.msra.mxu0 0
        %735 = vmatprep.subr.bf16.mxu0 0
        %736 = vmatpush1.bf16.msra.mxu0 0
        %737 = vmatprep.subr.bf16.mxu0 0
        %738 = vmatpush1.bf16.msra.mxu0 0
        %739 = vmatprep.subr.bf16.mxu0 0
        %740 = vmatpush1.bf16.msra.mxu0 0
        %741 = vmatprep.subr.bf16.mxu0 0
        %742 = vmatpush1.bf16.msra.mxu0 0
        %743 = vmatprep.subr.bf16.mxu0 0
        %744 = vmatpush1.bf16.msra.mxu0 0
        %745 = vmatprep.subr.bf16.mxu0 0
        %746 = vmatpush1.bf16.msra.mxu0 0
        %747 = vmatprep.subr.bf16.mxu0 0
        %748 = vmatpush1.bf16.msra.mxu0 0
        %749 = vmatprep.subr.bf16.mxu0 0
        %750 = vmatpush1.bf16.msra.mxu0 0
        %751 = vmatprep.subr.bf16.mxu0 0
        %752 = vmatpush1.bf16.msra.mxu0 0
        %753 = vmatprep.subr.bf16.mxu0 0
        %754 = vmatpush1.bf16.msra.mxu0 0
        %755 = vmatprep.mubr.bf16.mxu0 0
        %756 = vmatmul.mubr.bf16.gmra.mrb[0].mxu0 %v721
        %v757 = vpop.f32.mrb[0].mxu0
        %v758 = vadd.f32 %v705, %v757
        %v759 = vpop.f32.mrb[0].mxu0
        %v760 = vpop.f32.mrb[0].mxu0
        %v761 = vpop.f32.mrb[0].mxu0
        %762 = vdwg.mxu0
        %764 = vrot.lane.b32.xlu0 %v758, 120
        %v765 = vpop.permute.xlu0 %764
        %767 = vrot.lane.b32.xlu0 %v758, 112
        %v768 = vpop.permute.xlu0 %767
        %770 = vrot.lane.b32.xlu0 %v758, 104
        %v771 = vpop.permute.xlu0 %770
        %v773 = vpack.c.bf16 %v758, %v758
        %v774 = vpack.c.bf16 %v765, %v765
        %v775 = vpack.c.bf16 %v768, %v768
        %v776 = vpack.c.bf16 %v771, %v771
        %778 = vrot.lane.b32.xlu0 %v773, 96
        %v779 = vpop.permute.xlu0 %778
        %vm780 = vcmask 64512
        %v782 = vsel %vm780, %v773, 0
        %v785 = vsel %vm780, %v779, 0
        %787 = vmatprep.subr.bf16.mxu0 0
        %788 = vmatpush1.bf16.xpose.msra.mxu0 %v785
        %789 = vmatprep.subr.bf16.mxu0 0
        %790 = vmatpush1.bf16.xpose.msra.mxu0 0
        %791 = vmatprep.subr.bf16.mxu0 0
        %792 = vmatpush1.bf16.xpose.msra.mxu0 0
        %793 = vmatprep.subr.bf16.mxu0 0
        %794 = vmatpush1.bf16.xpose.msra.mxu0 0
        %795 = vmatprep.subr.bf16.mxu0 0
        %796 = vmatpush1.bf16.xpose.msra.mxu0 0
        %797 = vmatprep.subr.bf16.mxu0 0
        %798 = vmatpush1.bf16.xpose.msra.mxu0 0
        %799 = vmatprep.subr.bf16.mxu0 0
        %800 = vmatpush1.bf16.xpose.msra.mxu0 0
        %801 = vmatprep.subr.bf16.mxu0 0
        %802 = vmatpush1.bf16.xpose.msra.mxu0 0
        %803 = vmatprep.subr.bf16.mxu0 0
        %804 = vmatpush1.bf16.xpose.msra.mxu0 0
        %805 = vmatprep.subr.bf16.mxu0 0
        %806 = vmatpush1.bf16.xpose.msra.mxu0 0
        %807 = vmatprep.subr.bf16.mxu0 0
        %808 = vmatpush1.bf16.xpose.msra.mxu0 0
        %809 = vmatprep.subr.bf16.mxu0 0
        %810 = vmatpush1.bf16.xpose.msra.mxu0 0
        %811 = vmatprep.subr.bf16.mxu0 0
        %812 = vmatpush1.bf16.xpose.msra.mxu0 0
        %813 = vmatprep.subr.bf16.mxu0 0
        %814 = vmatpush1.bf16.xpose.msra.mxu0 0
        %815 = vmatprep.subr.bf16.mxu0 0
        %816 = vmatpush1.bf16.xpose.msra.mxu0 0
        %817 = vmatprep.subr.bf16.mxu0 0
        %818 = vmatpush1.bf16.xpose.msra.mxu0 0
        %819 = vmatprep.mubr.bf16.mxu0 0
        %820 = vmatmul.mubr.bf16.gmra.mrb[0].mxu0 %v782
        %v821 = vpop.f32.mrb[0].mxu0
        %v822 = vadd.f32 0.0, %v821
        %v823 = vpop.f32.mrb[0].mxu0
        %v824 = vpop.f32.mrb[0].mxu0
        %v825 = vpop.f32.mrb[0].mxu0
        %826 = vdwg.mxu0
        %828 = vrot.lane.b32.xlu0 %v774, 96
        %v829 = vpop.permute.xlu0 %828
        %v831 = vsel %vm780, %v774, 0
        %v834 = vsel %vm780, %v829, 0
        %836 = vmatprep.subr.bf16.mxu0 0
        %837 = vmatpush1.bf16.xpose.msra.mxu0 %v834
        %838 = vmatprep.subr.bf16.mxu0 0
        %839 = vmatpush1.bf16.xpose.msra.mxu0 0
        %840 = vmatprep.subr.bf16.mxu0 0
        %841 = vmatpush1.bf16.xpose.msra.mxu0 0
        %842 = vmatprep.subr.bf16.mxu0 0
        %843 = vmatpush1.bf16.xpose.msra.mxu0 0
        %844 = vmatprep.subr.bf16.mxu0 0
        %845 = vmatpush1.bf16.xpose.msra.mxu0 0
        %846 = vmatprep.subr.bf16.mxu0 0
        %847 = vmatpush1.bf16.xpose.msra.mxu0 0
        %848 = vmatprep.subr.bf16.mxu0 0
        %849 = vmatpush1.bf16.xpose.msra.mxu0 0
        %850 = vmatprep.subr.bf16.mxu0 0
        %851 = vmatpush1.bf16.xpose.msra.mxu0 0
        %852 = vmatprep.subr.bf16.mxu0 0
        %853 = vmatpush1.bf16.xpose.msra.mxu0 0
        %854 = vmatprep.subr.bf16.mxu0 0
        %855 = vmatpush1.bf16.xpose.msra.mxu0 0
        %856 = vmatprep.subr.bf16.mxu0 0
        %857 = vmatpush1.bf16.xpose.msra.mxu0 0
        %858 = vmatprep.subr.bf16.mxu0 0
        %859 = vmatpush1.bf16.xpose.msra.mxu0 0
        %860 = vmatprep.subr.bf16.mxu0 0
        %861 = vmatpush1.bf16.xpose.msra.mxu0 0
        %862 = vmatprep.subr.bf16.mxu0 0
        %863 = vmatpush1.bf16.xpose.msra.mxu0 0
        %864 = vmatprep.subr.bf16.mxu0 0
        %865 = vmatpush1.bf16.xpose.msra.mxu0 0
        %866 = vmatprep.subr.bf16.mxu0 0
        %867 = vmatpush1.bf16.xpose.msra.mxu0 0
        %868 = vmatprep.mubr.bf16.mxu0 0
        %869 = vmatmul.mubr.bf16.gmra.mrb[0].mxu0 %v831
        %v870 = vpop.f32.mrb[0].mxu0
        %v871 = vadd.f32 0.0, %v870
        %v872 = vpop.f32.mrb[0].mxu0
        %v873 = vpop.f32.mrb[0].mxu0
        %v874 = vpop.f32.mrb[0].mxu0
        %875 = vdwg.mxu0
        %877 = vrot.lane.b32.xlu0 %v775, 96
        %v878 = vpop.permute.xlu0 %877
        %v880 = vsel %vm780, %v775, 0
        %v883 = vsel %vm780, %v878, 0
        %885 = vmatprep.subr.bf16.mxu0 0
        %886 = vmatpush1.bf16.xpose.msra.mxu0 %v883
        %887 = vmatprep.subr.bf16.mxu0 0
        %888 = vmatpush1.bf16.xpose.msra.mxu0 0
        %889 = vmatprep.subr.bf16.mxu0 0
        %890 = vmatpush1.bf16.xpose.msra.mxu0 0
        %891 = vmatprep.subr.bf16.mxu0 0
        %892 = vmatpush1.bf16.xpose.msra.mxu0 0
        %893 = vmatprep.subr.bf16.mxu0 0
        %894 = vmatpush1.bf16.xpose.msra.mxu0 0
        %895 = vmatprep.subr.bf16.mxu0 0
        %896 = vmatpush1.bf16.xpose.msra.mxu0 0
        %897 = vmatprep.subr.bf16.mxu0 0
        %898 = vmatpush1.bf16.xpose.msra.mxu0 0
        %899 = vmatprep.subr.bf16.mxu0 0
        %900 = vmatpush1.bf16.xpose.msra.mxu0 0
        %901 = vmatprep.subr.bf16.mxu0 0
        %902 = vmatpush1.bf16.xpose.msra.mxu0 0
        %903 = vmatprep.subr.bf16.mxu0 0
        %904 = vmatpush1.bf16.xpose.msra.mxu0 0
        %905 = vmatprep.subr.bf16.mxu0 0
        %906 = vmatpush1.bf16.xpose.msra.mxu0 0
        %907 = vmatprep.subr.bf16.mxu0 0
        %908 = vmatpush1.bf16.xpose.msra.mxu0 0
        %909 = vmatprep.subr.bf16.mxu0 0
        %910 = vmatpush1.bf16.xpose.msra.mxu0 0
        %911 = vmatprep.subr.bf16.mxu0 0
        %912 = vmatpush1.bf16.xpose.msra.mxu0 0
        %913 = vmatprep.subr.bf16.mxu0 0
        %914 = vmatpush1.bf16.xpose.msra.mxu0 0
        %915 = vmatprep.subr.bf16.mxu0 0
        %916 = vmatpush1.bf16.xpose.msra.mxu0 0
        %917 = vmatprep.mubr.bf16.mxu0 0
        %918 = vmatmul.mubr.bf16.gmra.mrb[0].mxu0 %v880
        %v919 = vpop.f32.mrb[0].mxu0
        %v920 = vadd.f32 0.0, %v919
        %v921 = vpop.f32.mrb[0].mxu0
        %v922 = vpop.f32.mrb[0].mxu0
        %v923 = vpop.f32.mrb[0].mxu0
        %924 = vdwg.mxu0
        %926 = vrot.lane.b32.xlu0 %v776, 96
        %v927 = vpop.permute.xlu0 %926
        %v929 = vsel %vm780, %v776, 0
        %v932 = vsel %vm780, %v927, 0
        %934 = vmatprep.subr.bf16.mxu0 0
        %935 = vmatpush1.bf16.xpose.msra.mxu0 %v932
        %936 = vmatprep.subr.bf16.mxu0 0
        %937 = vmatpush1.bf16.xpose.msra.mxu0 0
        %938 = vmatprep.subr.bf16.mxu0 0
        %939 = vmatpush1.bf16.xpose.msra.mxu0 0
        %940 = vmatprep.subr.bf16.mxu0 0
        %941 = vmatpush1.bf16.xpose.msra.mxu0 0
        %942 = vmatprep.subr.bf16.mxu0 0
        %943 = vmatpush1.bf16.xpose.msra.mxu0 0
        %944 = vmatprep.subr.bf16.mxu0 0
        %945 = vmatpush1.bf16.xpose.msra.mxu0 0
        %946 = vmatprep.subr.bf16.mxu0 0
        %947 = vmatpush1.bf16.xpose.msra.mxu0 0
        %948 = vmatprep.subr.bf16.mxu0 0
        %949 = vmatpush1.bf16.xpose.msra.mxu0 0
        %950 = vmatprep.subr.bf16.mxu0 0
        %951 = vmatpush1.bf16.xpose.msra.mxu0 0
        %952 = vmatprep.subr.bf16.mxu0 0
        %953 = vmatpush1.bf16.xpose.msra.mxu0 0
        %954 = vmatprep.subr.bf16.mxu0 0
        %955 = vmatpush1.bf16.xpose.msra.mxu0 0
        %956 = vmatprep.subr.bf16.mxu0 0
        %957 = vmatpush1.bf16.xpose.msra.mxu0 0
        %958 = vmatprep.subr.bf16.mxu0 0
        %959 = vmatpush1.bf16.xpose.msra.mxu0 0
        %960 = vmatprep.subr.bf16.mxu0 0
        %961 = vmatpush1.bf16.xpose.msra.mxu0 0
        %962 = vmatprep.subr.bf16.mxu0 0
        %963 = vmatpush1.bf16.xpose.msra.mxu0 0
        %964 = vmatprep.subr.bf16.mxu0 0
        %965 = vmatpush1.bf16.xpose.msra.mxu0 0
        %966 = vmatprep.mubr.bf16.mxu0 0
        %967 = vmatmul.mubr.bf16.gmra.mrb[0].mxu0 %v929
        %v968 = vpop.f32.mrb[0].mxu0
        %v969 = vadd.f32 0.0, %v968
        %v970 = vpop.f32.mrb[0].mxu0
        %v971 = vpop.f32.mrb[0].mxu0
        %v972 = vpop.f32.mrb[0].mxu0
        %973 = vdwg.mxu0
        %v974 = vmul.f32 %v822, 0.35355338
        %v975 = vmul.f32 %v871, 0.35355338
        %v976 = vmul.f32 %v920, 0.35355338
        %v977 = vmul.f32 %v969, 0.35355338
        %v978 = vlaneseq
        %v979 = vand.u32 %v978, 127
        %v980 = vstv %s694
        %vm981 = vcmp.lt.s32.totalorder %v979, %v980
        %v982 = vsel %vm981, 1, 0
        %vm983 = vcmp.eq.s32.totalorder %v982, 1
        %v984 = vsel %vm983, %v974, -1e+09
        %v985 = vsel %vm983, %v975, -1e+09
        %v986 = vsel %vm983, %v976, -1e+09
        %v987 = vsel %vm983, %v977, -1e+09
        %v988 = vsel %vm780, %v984, -inf
        %989 = vmax.xlane.f32.xlu0 %v988
        %v990 = vpop.xlane.xlu0 %989
        %v991 = vsel %vm780, %v985, -inf
        %992 = vmax.xlane.f32.xlu0 %v991
        %v993 = vpop.xlane.xlu0 %992
        %v994 = vsel %vm780, %v986, -inf
        %995 = vmax.xlane.f32.xlu0 %v994
        %v996 = vpop.xlane.xlu0 %995
        %v997 = vsel %vm780, %v987, -inf
        %998 = vmax.xlane.f32.xlu0 %v997
        %v999 = vpop.xlane.xlu0 %998
        %v1000 = vsub.f32 %v984, %v990
        %v1001 = vsub.f32 %v985, %v993
        %v1002 = vsub.f32 %v986, %v996
        %v1003 = vsub.f32 %v987, %v999
        %v1004 = vmul.f32 %v1000, 1.442695
        %v1005 = vpow.pop %v1004
        %v1006 = vmul.f32 %v1001, 1.442695
        %v1007 = vpow.pop %v1006
        %v1008 = vmul.f32 %v1002, 1.442695
        %v1009 = vpow.pop %v1008
        %v1010 = vmul.f32 %v1003, 1.442695
        %v1011 = vpow.pop %v1010
        %v1012 = vsel %vm780, %v1005, 0.0
        %1013 = vadd.xlane.f32.xlu0 %v1012
        %v1014 = vpop.xlane.xlu0 %1013
        %v1015 = vsel %vm780, %v1007, 0.0
        %1016 = vadd.xlane.f32.xlu0 %v1015
        %v1017 = vpop.xlane.xlu0 %1016
        %v1018 = vsel %vm780, %v1009, 0.0
        %1019 = vadd.xlane.f32.xlu0 %v1018
        %v1020 = vpop.xlane.xlu0 %1019
        %v1021 = vsel %vm780, %v1011, 0.0
        %1022 = vadd.xlane.f32.xlu0 %v1021
        %v1023 = vpop.xlane.xlu0 %1022
        %v1024 = vrcp.pop %v1014
        %v1025 = vmul.f32 %v1005, %v1024
        %v1026 = vrcp.pop %v1017
        %v1027 = vmul.f32 %v1007, %v1026
        %v1028 = vrcp.pop %v1020
        %v1029 = vmul.f32 %v1009, %v1028
        %v1030 = vrcp.pop %v1023
        %v1031 = vmul.f32 %v1011, %v1030
        %v1032 = vpack.c.bf16 %v1025, %v1025
        %v1033 = vpack.c.bf16 %v1027, %v1027
        %v1034 = vpack.c.bf16 %v1029, %v1029
        %v1035 = vpack.c.bf16 %v1031, %v1031
        %1036 = vrot.lane.b32.xlu0 %v773, 64
        %v1037 = vpop.permute.xlu0 %1036
        %v1039 = vsel %vm780, %v1032, 0
        %vm1041 = vcmask 1043456
        %v1043 = vsel %vm1041, %v1037, 0
        %1045 = vmatprep.subr.bf16.mxu0 0
        %1046 = vmatpush1.bf16.msra.mxu0 %v1043
        %1047 = vmatprep.subr.bf16.mxu0 0
        %1048 = vmatpush1.bf16.msra.mxu0 0
        %1049 = vmatprep.subr.bf16.mxu0 0
        %1050 = vmatpush1.bf16.msra.mxu0 0
        %1051 = vmatprep.subr.bf16.mxu0 0
        %1052 = vmatpush1.bf16.msra.mxu0 0
        %1053 = vmatprep.subr.bf16.mxu0 0
        %1054 = vmatpush1.bf16.msra.mxu0 0
        %1055 = vmatprep.subr.bf16.mxu0 0
        %1056 = vmatpush1.bf16.msra.mxu0 0
        %1057 = vmatprep.subr.bf16.mxu0 0
        %1058 = vmatpush1.bf16.msra.mxu0 0
        %1059 = vmatprep.subr.bf16.mxu0 0
        %1060 = vmatpush1.bf16.msra.mxu0 0
        %1061 = vmatprep.subr.bf16.mxu0 0
        %1062 = vmatpush1.bf16.msra.mxu0 0
        %1063 = vmatprep.subr.bf16.mxu0 0
        %1064 = vmatpush1.bf16.msra.mxu0 0
        %1065 = vmatprep.subr.bf16.mxu0 0
        %1066 = vmatpush1.bf16.msra.mxu0 0
        %1067 = vmatprep.subr.bf16.mxu0 0
        %1068 = vmatpush1.bf16.msra.mxu0 0
        %1069 = vmatprep.subr.bf16.mxu0 0
        %1070 = vmatpush1.bf16.msra.mxu0 0
        %1071 = vmatprep.subr.bf16.mxu0 0
        %1072 = vmatpush1.bf16.msra.mxu0 0
        %1073 = vmatprep.subr.bf16.mxu0 0
        %1074 = vmatpush1.bf16.msra.mxu0 0
        %1075 = vmatprep.subr.bf16.mxu0 0
        %1076 = vmatpush1.bf16.msra.mxu0 0
        %1077 = vmatprep.mubr.bf16.mxu0 0
        %1078 = vmatmul.mubr.bf16.gmra.mrb[0].mxu0 %v1039
        %v1079 = vpop.f32.mrb[0].mxu0
        %v1080 = vadd.f32 0.0, %v1079
        %v1081 = vpop.f32.mrb[0].mxu0
        %v1082 = vpop.f32.mrb[0].mxu0
        %v1083 = vpop.f32.mrb[0].mxu0
        %1084 = vdwg.mxu0
        %1085 = vrot.lane.b32.xlu0 %v774, 64
        %v1086 = vpop.permute.xlu0 %1085
        %v1088 = vsel %vm780, %v1033, 0
        %v1091 = vsel %vm1041, %v1086, 0
        %1093 = vmatprep.subr.bf16.mxu0 0
        %1094 = vmatpush1.bf16.msra.mxu0 %v1091
        %1095 = vmatprep.subr.bf16.mxu0 0
        %1096 = vmatpush1.bf16.msra.mxu0 0
        %1097 = vmatprep.subr.bf16.mxu0 0
        %1098 = vmatpush1.bf16.msra.mxu0 0
        %1099 = vmatprep.subr.bf16.mxu0 0
        %1100 = vmatpush1.bf16.msra.mxu0 0
        %1101 = vmatprep.subr.bf16.mxu0 0
        %1102 = vmatpush1.bf16.msra.mxu0 0
        %1103 = vmatprep.subr.bf16.mxu0 0
        %1104 = vmatpush1.bf16.msra.mxu0 0
        %1105 = vmatprep.subr.bf16.mxu0 0
        %1106 = vmatpush1.bf16.msra.mxu0 0
        %1107 = vmatprep.subr.bf16.mxu0 0
        %1108 = vmatpush1.bf16.msra.mxu0 0
        %1109 = vmatprep.subr.bf16.mxu0 0
        %1110 = vmatpush1.bf16.msra.mxu0 0
        %1111 = vmatprep.subr.bf16.mxu0 0
        %1112 = vmatpush1.bf16.msra.mxu0 0
        %1113 = vmatprep.subr.bf16.mxu0 0
        %1114 = vmatpush1.bf16.msra.mxu0 0
        %1115 = vmatprep.subr.bf16.mxu0 0
        %1116 = vmatpush1.bf16.msra.mxu0 0
        %1117 = vmatprep.subr.bf16.mxu0 0
        %1118 = vmatpush1.bf16.msra.mxu0 0
        %1119 = vmatprep.subr.bf16.mxu0 0
        %1120 = vmatpush1.bf16.msra.mxu0 0
        %1121 = vmatprep.subr.bf16.mxu0 0
        %1122 = vmatpush1.bf16.msra.mxu0 0
        %1123 = vmatprep.subr.bf16.mxu0 0
        %1124 = vmatpush1.bf16.msra.mxu0 0
        %1125 = vmatprep.mubr.bf16.mxu0 0
        %1126 = vmatmul.mubr.bf16.gmra.mrb[0].mxu0 %v1088
        %v1127 = vpop.f32.mrb[0].mxu0
        %v1128 = vadd.f32 0.0, %v1127
        %v1129 = vpop.f32.mrb[0].mxu0
        %v1130 = vpop.f32.mrb[0].mxu0
        %v1131 = vpop.f32.mrb[0].mxu0
        %1132 = vdwg.mxu0
        %1133 = vrot.lane.b32.xlu0 %v775, 64
        %v1134 = vpop.permute.xlu0 %1133
        %v1136 = vsel %vm780, %v1034, 0
        %v1139 = vsel %vm1041, %v1134, 0
        %1141 = vmatprep.subr.bf16.mxu0 0
        %1142 = vmatpush1.bf16.msra.mxu0 %v1139
        %1143 = vmatprep.subr.bf16.mxu0 0
        %1144 = vmatpush1.bf16.msra.mxu0 0
        %1145 = vmatprep.subr.bf16.mxu0 0
        %1146 = vmatpush1.bf16.msra.mxu0 0
        %1147 = vmatprep.subr.bf16.mxu0 0
        %1148 = vmatpush1.bf16.msra.mxu0 0
        %1149 = vmatprep.subr.bf16.mxu0 0
        %1150 = vmatpush1.bf16.msra.mxu0 0
        %1151 = vmatprep.subr.bf16.mxu0 0
        %1152 = vmatpush1.bf16.msra.mxu0 0
        %1153 = vmatprep.subr.bf16.mxu0 0
        %1154 = vmatpush1.bf16.msra.mxu0 0
        %1155 = vmatprep.subr.bf16.mxu0 0
        %1156 = vmatpush1.bf16.msra.mxu0 0
        %1157 = vmatprep.subr.bf16.mxu0 0
        %1158 = vmatpush1.bf16.msra.mxu0 0
        %1159 = vmatprep.subr.bf16.mxu0 0
        %1160 = vmatpush1.bf16.msra.mxu0 0
        %1161 = vmatprep.subr.bf16.mxu0 0
        %1162 = vmatpush1.bf16.msra.mxu0 0
        %1163 = vmatprep.subr.bf16.mxu0 0
        %1164 = vmatpush1.bf16.msra.mxu0 0
        %1165 = vmatprep.subr.bf16.mxu0 0
        %1166 = vmatpush1.bf16.msra.mxu0 0
        %1167 = vmatprep.subr.bf16.mxu0 0
        %1168 = vmatpush1.bf16.msra.mxu0 0
        %1169 = vmatprep.subr.bf16.mxu0 0
        %1170 = vmatpush1.bf16.msra.mxu0 0
        %1171 = vmatprep.subr.bf16.mxu0 0
        %1172 = vmatpush1.bf16.msra.mxu0 0
        %1173 = vmatprep.mubr.bf16.mxu0 0
        %1174 = vmatmul.mubr.bf16.gmra.mrb[0].mxu0 %v1136
        %v1175 = vpop.f32.mrb[0].mxu0
        %v1176 = vadd.f32 0.0, %v1175
        %v1177 = vpop.f32.mrb[0].mxu0
        %v1178 = vpop.f32.mrb[0].mxu0
        %v1179 = vpop.f32.mrb[0].mxu0
        %1180 = vdwg.mxu0
        %1181 = vrot.lane.b32.xlu0 %v776, 64
        %v1182 = vpop.permute.xlu0 %1181
        %v1184 = vsel %vm780, %v1035, 0
        %v1187 = vsel %vm1041, %v1182, 0
        %1189 = vmatprep.subr.bf16.mxu0 0
        %1190 = vmatpush1.bf16.msra.mxu0 %v1187
        %1191 = vmatprep.subr.bf16.mxu0 0
        %1192 = vmatpush1.bf16.msra.mxu0 0
        %1193 = vmatprep.subr.bf16.mxu0 0
        %1194 = vmatpush1.bf16.msra.mxu0 0
        %1195 = vmatprep.subr.bf16.mxu0 0
        %1196 = vmatpush1.bf16.msra.mxu0 0
        %1197 = vmatprep.subr.bf16.mxu0 0
        %1198 = vmatpush1.bf16.msra.mxu0 0
        %1199 = vmatprep.subr.bf16.mxu0 0
        %1200 = vmatpush1.bf16.msra.mxu0 0
        %1201 = vmatprep.subr.bf16.mxu0 0
        %1202 = vmatpush1.bf16.msra.mxu0 0
        %1203 = vmatprep.subr.bf16.mxu0 0
        %1204 = vmatpush1.bf16.msra.mxu0 0
        %1205 = vmatprep.subr.bf16.mxu0 0
        %1206 = vmatpush1.bf16.msra.mxu0 0
        %1207 = vmatprep.subr.bf16.mxu0 0
        %1208 = vmatpush1.bf16.msra.mxu0 0
        %1209 = vmatprep.subr.bf16.mxu0 0
        %1210 = vmatpush1.bf16.msra.mxu0 0
        %1211 = vmatprep.subr.bf16.mxu0 0
        %1212 = vmatpush1.bf16.msra.mxu0 0
        %1213 = vmatprep.subr.bf16.mxu0 0
        %1214 = vmatpush1.bf16.msra.mxu0 0
        %1215 = vmatprep.subr.bf16.mxu0 0
        %1216 = vmatpush1.bf16.msra.mxu0 0
        %1217 = vmatprep.subr.bf16.mxu0 0
        %1218 = vmatpush1.bf16.msra.mxu0 0
        %1219 = vmatprep.subr.bf16.mxu0 0
        %1220 = vmatpush1.bf16.msra.mxu0 0
        %1221 = vmatprep.mubr.bf16.mxu0 0
        %1222 = vmatmul.mubr.bf16.gmra.mrb[0].mxu0 %v1184
        %v1223 = vpop.f32.mrb[0].mxu0
        %v1224 = vadd.f32 0.0, %v1223
        %v1225 = vpop.f32.mrb[0].mxu0
        %v1226 = vpop.f32.mrb[0].mxu0
        %v1227 = vpop.f32.mrb[0].mxu0
        %1228 = vdwg.mxu0
        %1230 = vrot.lane.b32.xlu0 %v1128, 8
        %v1231 = vpop.permute.xlu0 %1230
        %1234 = vrot.lane.b32.xlu0 %v1176, 16
        %v1235 = vpop.permute.xlu0 %1234
        %1238 = vrot.lane.b32.xlu0 %v1224, 24
        %v1239 = vpop.permute.xlu0 %1238
        %v1241 = vsel %vm780, %v1080, %v1231
        %vm1242 = vcmask 130048
        %v1243 = vsel %vm1242, %v1241, %v1235
        %vm1244 = vcmask 195584
        %v1245 = vsel %vm1244, %v1243, %v1239
        %v1246 = vpack.c.bf16 %v1245, %v1245
        %v1247 = vld [vmem:[%s656] sm:$0xf]
        %v1248 = vld [vmem:[%s656 + $0x4] sm:$0xf]
        %v1249 = vld [vmem:[%s656 + $0x8] sm:$0xf]
        %v1250 = vld [vmem:[%s656 + $0xc] sm:$0xf]
        %v1251 = vld [vmem:[%s659] sm:$0x1]
        %v1253 = vlaneseq
        %v1254 = vshrl.u32 %v1253, 7
        %v1255 = vsub.s32 0, %v1254
        %v1256 = vrot.slane %v1251, %v1255
        %v1262 = vunpack.c.l.b16 %v1247
        %v1263 = vunpack.c.l.b16 %v1248
        %v1264 = vunpack.c.l.b16 %v1249
        %v1265 = vunpack.c.l.b16 %v1250
        %v1266 = vpack.c.b16 %v1263, %v1262
        %v1267 = vpack.c.b16 %v1265, %v1264
        %v1271 = vsel %vm719, %v1246, 0
        %1273 = vmatprep.subr.bf16.mxu0 0
        %1274 = vmatpush1.bf16.msra.mxu0 %v1266
        %1275 = vmatprep.subr.bf16.mxu0 0
        %1276 = vmatpush1.bf16.msra.mxu0 %v1267
        %1277 = vmatprep.subr.bf16.mxu0 0
        %1278 = vmatpush1.bf16.msra.mxu0 0
        %1279 = vmatprep.subr.bf16.mxu0 0
        %1280 = vmatpush1.bf16.msra.mxu0 0
        %1281 = vmatprep.subr.bf16.mxu0 0
        %1282 = vmatpush1.bf16.msra.mxu0 0
        %1283 = vmatprep.subr.bf16.mxu0 0
        %1284 = vmatpush1.bf16.msra.mxu0 0
        %1285 = vmatprep.subr.bf16.mxu0 0
        %1286 = vmatpush1.bf16.msra.mxu0 0
        %1287 = vmatprep.subr.bf16.mxu0 0
        %1288 = vmatpush1.bf16.msra.mxu0 0
        %1289 = vmatprep.subr.bf16.mxu0 0
        %1290 = vmatpush1.bf16.msra.mxu0 0
        %1291 = vmatprep.subr.bf16.mxu0 0
        %1292 = vmatpush1.bf16.msra.mxu0 0
        %1293 = vmatprep.subr.bf16.mxu0 0
        %1294 = vmatpush1.bf16.msra.mxu0 0
        %1295 = vmatprep.subr.bf16.mxu0 0
        %1296 = vmatpush1.bf16.msra.mxu0 0
        %1297 = vmatprep.subr.bf16.mxu0 0
        %1298 = vmatpush1.bf16.msra.mxu0 0
        %1299 = vmatprep.subr.bf16.mxu0 0
        %1300 = vmatpush1.bf16.msra.mxu0 0
        %1301 = vmatprep.subr.bf16.mxu0 0
        %1302 = vmatpush1.bf16.msra.mxu0 0
        %1303 = vmatprep.subr.bf16.mxu0 0
        %1304 = vmatpush1.bf16.msra.mxu0 0
        %1305 = vmatprep.mubr.bf16.mxu0 0
        %1306 = vmatmul.mubr.bf16.gmra.mrb[0].mxu0 %v1271
        %v1307 = vpop.f32.mrb[0].mxu0
        %v1308 = vadd.f32 %v1256, %v1307
        %v1309 = vpop.f32.mrb[0].mxu0
        %v1310 = vpop.f32.mrb[0].mxu0
        %v1311 = vpop.f32.mrb[0].mxu0
        %1312 = vdwg.mxu0
        %v1313 = vadd.f32 %v693, %v1308
        %v1314 = vld [vmem:[%s662] sm:$0x1]
        %v1315 = vld [vmem:[%s665] sm:$0x1]
        %v1316 = vsel %vm719, %v1313, 0.0
        %1317 = vadd.xlane.f32.xlu0 %v1316
        %v1318 = vpop.xlane.xlu0 %1317
        %v1319 = vrcp.pop 32.0
        %v1320 = vmul.f32 %v1318, %v1319
        %v1321 = vsub.f32 %v1313, %v1320
        %v1322 = vmul.f32 %v1321, %v1321
        %v1323 = vsel %vm719, %v1322, 0.0
        %1324 = vadd.xlane.f32.xlu0 %v1323
        %v1325 = vpop.xlane.xlu0 %1324
        %v1326 = vmul.f32 %v1325, %v1319
        %v1327 = vadd.f32 %v1326, 1e-05
        %v1328 = vrsqrt.pop %v1327
        %v1329 = vmul.f32 %v1321, %v1328
        %v1331 = vlaneseq
        %v1332 = vshrl.u32 %v1331, 7
        %v1333 = vsub.s32 0, %v1332
        %v1334 = vrot.slane %v1314, %v1333
        %v1336 = vmul.f32 %v1329, %v1334
        %v1338 = vlaneseq
        %v1339 = vshrl.u32 %v1338, 7
        %v1340 = vsub.s32 0, %v1339
        %v1341 = vrot.slane %v1315, %v1340
        %v1343 = vadd.f32 %v1336, %v1341
        %v1344 = vpack.c.bf16 %v1343, %v1343
        %v1345 = vld [vmem:[%s676] sm:$0xf]
        %v1346 = vld [vmem:[%s676 + $0x4] sm:$0xf]
        %v1347 = vld [vmem:[%s676 + $0x8] sm:$0xf]
        %v1348 = vld [vmem:[%s676 + $0xc] sm:$0xf]
        %v1349 = vld [vmem:[%s556] sm:$0x1]
        %v1351 = vlaneseq
        %v1352 = vshrl.u32 %v1351, 7
        %v1353 = vsub.s32 0, %v1352
        %v1354 = vrot.slane %v1349, %v1353
        %v1360 = vunpack.c.l.b16 %v1345
        %v1361 = vunpack.c.l.b16 %v1346
        %v1362 = vunpack.c.l.b16 %v1347
        %v1363 = vunpack.c.l.b16 %v1348
        %v1364 = vpack.c.b16 %v1361, %v1360
        %v1365 = vpack.c.b16 %v1363, %v1362
        %v1369 = vsel %vm719, %v1344, 0
        %1371 = vmatprep.subr.bf16.mxu0 0
        %1372 = vmatpush1.bf16.msra.mxu0 %v1364
        %1373 = vmatprep.subr.bf16.mxu0 0
        %1374 = vmatpush1.bf16.msra.mxu0 %v1365
        %1375 = vmatprep.subr.bf16.mxu0 0
        %1376 = vmatpush1.bf16.msra.mxu0 0
        %1377 = vmatprep.subr.bf16.mxu0 0
        %1378 = vmatpush1.bf16.msra.mxu0 0
        %1379 = vmatprep.subr.bf16.mxu0 0
        %1380 = vmatpush1.bf16.msra.mxu0 0
        %1381 = vmatprep.subr.bf16.mxu0 0
        %1382 = vmatpush1.bf16.msra.mxu0 0
        %1383 = vmatprep.subr.bf16.mxu0 0
        %1384 = vmatpush1.bf16.msra.mxu0 0
        %1385 = vmatprep.subr.bf16.mxu0 0
        %1386 = vmatpush1.bf16.msra.mxu0 0
        %1387 = vmatprep.subr.bf16.mxu0 0
        %1388 = vmatpush1.bf16.msra.mxu0 0
        %1389 = vmatprep.subr.bf16.mxu0 0
        %1390 = vmatpush1.bf16.msra.mxu0 0
        %1391 = vmatprep.subr.bf16.mxu0 0
        %1392 = vmatpush1.bf16.msra.mxu0 0
        %1393 = vmatprep.subr.bf16.mxu0 0
        %1394 = vmatpush1.bf16.msra.mxu0 0
        %1395 = vmatprep.subr.bf16.mxu0 0
        %1396 = vmatpush1.bf16.msra.mxu0 0
        %1397 = vmatprep.subr.bf16.mxu0 0
        %1398 = vmatpush1.bf16.msra.mxu0 0
        %1399 = vmatprep.subr.bf16.mxu0 0
        %1400 = vmatpush1.bf16.msra.mxu0 0
        %1401 = vmatprep.subr.bf16.mxu0 0
        %1402 = vmatpush1.bf16.msra.mxu0 0
        %1403 = vmatprep.mubr.bf16.mxu0 0
        %1404 = vmatmul.mubr.bf16.gmra.mrb[0].mxu0 %v1369
        %v1405 = vpop.f32.mrb[0].mxu0
        %v1406 = vadd.f32 %v1354, %v1405
        %v1407 = vpop.f32.mrb[0].mxu0
        %v1408 = vpop.f32.mrb[0].mxu0
        %v1409 = vpop.f32.mrb[0].mxu0
        %1410 = vdwg.mxu0
        %v1411 = vmax.f32 %v1406, 0.0
        %v1412 = vpack.c.bf16 %v1411, %v1411
        %v1413 = vld [vmem:[%s681] sm:$0xf]
        %v1414 = vld [vmem:[%s681 + $0x4] sm:$0xf]
        %v1415 = vld [vmem:[%s681 + $0x8] sm:$0xf]
        %v1416 = vld [vmem:[%s681 + $0xc] sm:$0xf]
        %v1417 = vld [vmem:[%s681 + $0x10] sm:$0xf]
        %v1418 = vld [vmem:[%s681 + $0x14] sm:$0xf]
        %v1419 = vld [vmem:[%s681 + $0x18] sm:$0xf]
        %v1420 = vld [vmem:[%s681 + $0x1c] sm:$0xf]
        %v1421 = vld [vmem:[%s684] sm:$0x1]
        %v1423 = vlaneseq
        %v1424 = vshrl.u32 %v1423, 7
        %v1425 = vsub.s32 0, %v1424
        %v1426 = vrot.slane %v1421, %v1425
        %v1436 = vunpack.c.l.b16 %v1413
        %v1437 = vunpack.c.l.b16 %v1414
        %v1438 = vunpack.c.l.b16 %v1415
        %v1439 = vunpack.c.l.b16 %v1416
        %v1440 = vunpack.c.l.b16 %v1417
        %v1441 = vunpack.c.l.b16 %v1418
        %v1442 = vunpack.c.l.b16 %v1419
        %v1443 = vunpack.c.l.b16 %v1420
        %v1444 = vpack.c.b16 %v1437, %v1436
        %v1445 = vpack.c.b16 %v1439, %v1438
        %v1446 = vpack.c.b16 %v1441, %v1440
        %v1447 = vpack.c.b16 %v1443, %v1442
        %vm1452 = vcmask 523264
        %v1454 = vsel %vm1452, %v1412, 0
        %1456 = vmatprep.subr.bf16.mxu0 0
        %1457 = vmatpush1.bf16.msra.mxu0 %v1444
        %1458 = vmatprep.subr.bf16.mxu0 0
        %1459 = vmatpush1.bf16.msra.mxu0 %v1445
        %1460 = vmatprep.subr.bf16.mxu0 0
        %1461 = vmatpush1.bf16.msra.mxu0 %v1446
        %1462 = vmatprep.subr.bf16.mxu0 0
        %1463 = vmatpush1.bf16.msra.mxu0 %v1447
        %1464 = vmatprep.subr.bf16.mxu0 0
        %1465 = vmatpush1.bf16.msra.mxu0 0
        %1466 = vmatprep.subr.bf16.mxu0 0
        %1467 = vmatpush1.bf16.msra.mxu0 0
        %1468 = vmatprep.subr.bf16.mxu0 0
        %1469 = vmatpush1.bf16.msra.mxu0 0
        %1470 = vmatprep.subr.bf16.mxu0 0
        %1471 = vmatpush1.bf16.msra.mxu0 0
        %1472 = vmatprep.subr.bf16.mxu0 0
        %1473 = vmatpush1.bf16.msra.mxu0 0
        %1474 = vmatprep.subr.bf16.mxu0 0
        %1475 = vmatpush1.bf16.msra.mxu0 0
        %1476 = vmatprep.subr.bf16.mxu0 0
        %1477 = vmatpush1.bf16.msra.mxu0 0
        %1478 = vmatprep.subr.bf16.mxu0 0
        %1479 = vmatpush1.bf16.msra.mxu0 0
        %1480 = vmatprep.subr.bf16.mxu0 0
        %1481 = vmatpush1.bf16.msra.mxu0 0
        %1482 = vmatprep.subr.bf16.mxu0 0
        %1483 = vmatpush1.bf16.msra.mxu0 0
        %1484 = vmatprep.subr.bf16.mxu0 0
        %1485 = vmatpush1.bf16.msra.mxu0 0
        %1486 = vmatprep.subr.bf16.mxu0 0
        %1487 = vmatpush1.bf16.msra.mxu0 0
        %1488 = vmatprep.mubr.bf16.mxu0 0
        %1489 = vmatmul.mubr.bf16.gmra.mrb[0].mxu0 %v1454
        %v1490 = vpop.f32.mrb[0].mxu0
        %v1491 = vadd.f32 %v1426, %v1490
        %v1492 = vpop.f32.mrb[0].mxu0
        %v1493 = vpop.f32.mrb[0].mxu0
        %v1494 = vpop.f32.mrb[0].mxu0
        %1495 = vdwg.mxu0
        %v1496 = vadd.f32 %v1343, %v1491
        %v1497 = vld [vmem:[%s668] sm:$0x1]
        %v1498 = vld [vmem:[%s671] sm:$0x1]
        %v1499 = vsel %vm719, %v1496, 0.0
        %1500 = vadd.xlane.f32.xlu0 %v1499
        %v1501 = vpop.xlane.xlu0 %1500
        %v1502 = vmul.f32 %v1501, %v1319
        %v1503 = vsub.f32 %v1496, %v1502
        %v1504 = vmul.f32 %v1503, %v1503
        %v1505 = vsel %vm719, %v1504, 0.0
        %1506 = vadd.xlane.f32.xlu0 %v1505
        %v1507 = vpop.xlane.xlu0 %1506
        %v1508 = vmul.f32 %v1507, %v1319
        %v1509 = vadd.f32 %v1508, 1e-05
        %v1510 = vrsqrt.pop %v1509
        %v1511 = vmul.f32 %v1503, %v1510
        %v1513 = vlaneseq
        %v1514 = vshrl.u32 %v1513, 7
        %v1515 = vsub.s32 0, %v1514
        %v1516 = vrot.slane %v1497, %v1515
        %v1518 = vmul.f32 %v1511, %v1516
        %v1520 = vlaneseq
        %v1521 = vshrl.u32 %v1520, 7
        %v1522 = vsub.s32 0, %v1521
        %v1523 = vrot.slane %v1498, %v1522
        %v1525 = vadd.f32 %v1518, %v1523
        %1526 = vst.msk [vmem:[%s643] sm:$0xff] %vm719, %v1525
        %s1527 = sand.u32 %s396, 1
        %s1528 = scalar_lea.sflag [#allocation6], %s1527
        %s1529 = sand.u32 %s396, 1
        %s1530 = smul.addr %s1529, 8
        %s1531 = scalar_lea.vmem [#allocation9], %s1530
        // Predicated region
        $region85: #{tpu_custom_call.1} parent=71 // pred_check
          %p1532 = pneg %p406
        $region86: #{tpu_custom_call.1} parent=71 // pred_check_branch
          %1534 = sbr.rel (%p1532) target = $region88
        $region87: #{tpu_custom_call.1} parent=71 // pred_region
          %s1536 = ssub.s32 128, 128
          %1537 = vsyncadd %s1528, %s1536
          %s1538 = smul.addr %s42, 128
          %s1539 = scalar_lea.hbm %s14, %s1538
          %s1541 = sshll.u32 %s1531, 4
          %s1542 = int_to_ptr.vmem [resolvable:$true] %s1541
          %1544 = dma.vmem_to_hbm [thread:$0]  %s1542, 128, %s1539, %s1528
        $region88: #{tpu_custom_call.1} parent=71 // pred_fallthru
          _
      $region72: #{tpu_custom_call.1} parent=5 // pred_fallthru
        _
      %p1545 = scmp.le.s32.totalorder 2, %s33
      // Predicated region
      $region89: #{tpu_custom_call.1} parent=5 // pred_check
        %p1546 = pneg %p1545
      $region90: #{tpu_custom_call.1} parent=5 // pred_check_branch
        %1548 = sbr.rel (%p1546) target = $region92
      $region91: #{tpu_custom_call.1} parent=5 // pred_region
        %s1549 = ssub.s32 %s33, 2
        // Predicated region
        $region93: #{tpu_custom_call.1} parent=91 // pred_check
          %p1550 = pneg %p412
        $region94: #{tpu_custom_call.1} parent=91 // pred_check_branch
          %1552 = sbr.rel (%p1550) target = $region96
        $region95: #{tpu_custom_call.1} parent=91 // pred_region
          %s1553 = sand.u32 %s397, 1
          %s1554 = scalar_lea.sflag [#allocation6], %s1553
          %s1555 = sand.u32 %s397, 1
          %s1556 = smul.addr %s1555, 8
          %s1557 = scalar_lea.vmem [#allocation9], %s1556
          %1558 = dma.done %s1554, 128
        $region96: #{tpu_custom_call.1} parent=91 // pred_fallthru
          _
      $region92: #{tpu_custom_call.1} parent=5 // pred_fallthru
        _
    $region6: #{tpu_custom_call.1} parent=1 // loop_footer
      %s37 = sadd.s32 1, %s33
    $region7: #{tpu_custom_call.1} parent=1 // loop_footer_branch
      %32 = sbr.rel target = $region3
    $region8: #{tpu_custom_call.1} parent=1 // loop_exit
      _
    %1559 = vsyncpa [#allocation5], 1
    %s1560 = scalar_lea.sflag [#allocation5], 1
    %1561 = vsyncpa %s1560, 1
    %1562 = vsyncpa [#allocation8], 1
    %s1563 = scalar_lea.sflag [#allocation8], 1
    %1564 = vsyncpa %s1563, 1
    %1565 = vsyncpa [#allocation6], 1
    %s1566 = scalar_lea.sflag [#allocation6], 1
    %1567 = vsyncpa %s1566, 1

</llo_original>
